<compile_context>
chip_gen: v7x
topology: tpu7x:2x2x1
jax: 0.10.0
libtpu: 0.0.40
codegen_flags: <defaults>
</compile_context>

<pallas_src>
import functools
import math

import jax
import jax.numpy as jnp
from jax import lax
from jax.experimental import pallas as pl
from jax.experimental.pallas import tpu as pltpu


def mha_kernel(x_ref, wq_ref, bq_ref, wk_ref, bk_ref, wv_ref, bv_ref,
               wf_ref, bf_ref, out_ref, attn_ref,
               *, n_head, d_k, d_v, b_blk, seq, inv_temp):
    """One block of `b_blk` batch elements per grid step.

    x_ref    : [b_blk, T, d_model]
    w*_ref   : [in, out] (pre-transposed), b*_ref: [1, out]
    out_ref  : [b_blk, T, d_model]
    attn_ref : [b_blk, T, n_head*T]   (lane-dense; heads folded into lanes)
    """
    x = x_ref[...]                                        # [b_blk, T, D] f32
    d_model = x.shape[-1]
    xm = x.reshape(b_blk * seq, d_model)                  # fold batch into M

    # --- QKV projections on the full [b_blk*T, D] slab (MXU, f32 accumulate) ---
    q = (jnp.dot(xm, wq_ref[...], preferred_element_type=jnp.float32)
         + bq_ref[...]) * inv_temp                        # scale q once
    k = jnp.dot(xm, wk_ref[...], preferred_element_type=jnp.float32) + bk_ref[...]
    v = jnp.dot(xm, wv_ref[...], preferred_element_type=jnp.float32) + bv_ref[...]

    wf = wf_ref[...]                                      # [n_head*d_v, D]
    bf = bf_ref[...]                                      # [1, D]

    # --- per (batch, head) scaled dot-product attention (statically unrolled) ---
    # TODO(synk): masked attention (attn.masked_fill(mask, -inf)) not
    # implemented; only the mask=None path of the module is supported.
    for b in range(b_blk):
        rows = slice(b * seq, (b + 1) * seq)
        out_b = None
        attn_cols = []
        for h in range(n_head):
            qcols = slice(h * d_k, (h + 1) * d_k)
            vcols = slice(h * d_v, (h + 1) * d_v)
            q_bh = q[rows, qcols]                         # [T, d_k]
            k_bh = k[rows, qcols]                         # [T, d_k]
            v_bh = v[rows, vcols]                         # [T, d_v]

            # q_bh @ k_bh^T without materializing the transpose.
            s = lax.dot_general(q_bh, k_bh, (((1,), (1,)), ((), ())),
                                preferred_element_type=jnp.float32)   # [T, T]
            s = s - jnp.max(s, axis=-1, keepdims=True)    # stable softmax
            e = jnp.exp(s)
            p = e * pl.reciprocal(jnp.sum(e, axis=-1, keepdims=True),
                                  approx=False)           # [T, T]
            attn_cols.append(p)

            # dropout p=0.0 -> identity; accumulate the output projection
            # over heads instead of concatenating context in scratch.
            ctx = jnp.dot(p, v_bh, preferred_element_type=jnp.float32)    # [T, d_v]
            contrib = jnp.dot(ctx, wf[vcols, :],
                              preferred_element_type=jnp.float32)         # [T, D]
            out_b = contrib if out_b is None else out_b + contrib

        # One lane-dense full-width store per batch element.
        attn_ref[b] = jnp.concatenate(attn_cols, axis=-1)  # [T, n_head*T]
        out_ref[b] = out_b + bf + x[b]                      # fc bias + residual


def _pick_batch_block(batch, max_blk=8):
    """Largest divisor of `batch` not exceeding max_blk (keeps grid exact)."""
    for cand in range(min(batch, max_blk), 0, -1):
        if batch % cand == 0:
            return cand
    return 1


@functools.partial(jax.jit, static_argnames=("n_head", "d_k", "d_v"))
def mha_forward(x, params, *, n_head, d_k, d_v):
    B, T, D = x.shape
    wq, bq, wk, bk, wv, bv, wf, bf = params
    inv_temp = 1.0 / math.sqrt(D)                         # temperature = sqrt(d_model)

    hk, hv = n_head * d_k, n_head * d_v
    b_blk = _pick_batch_block(B)
    grid = (B // b_blk,)

    kernel = functools.partial(mha_kernel, n_head=n_head, d_k=d_k, d_v=d_v,
                               b_blk=b_blk, seq=T, inv_temp=inv_temp)

    # Weights/biases: full-array blocks with constant index_map -> VMEM-resident
    # across the batch grid (fetched once, never re-DMA'd).
    def resident(shape):
        return pl.BlockSpec(shape, lambda i: (0, 0))

    # Explicit VMEM budget: resident weights + double-buffered x/out/attn blocks.
    f32b = 4
    w_bytes = f32b * (D * hk + hk + D * hk + hk + D * hv + hv + hv * D + D)
    io_blk_bytes = f32b * (b_blk * T * D * 2 + b_blk * T * n_head * T)
    vmem_budget = 2 * w_bytes + 2 * io_blk_bytes + (2 << 20)
    vmem_limit = max(min(vmem_budget, 64 << 20), 4 << 20)  # valid on v5e/v6e/v7x

    out, attn_raw = pl.pallas_call(
        kernel,
        out_shape=(jax.ShapeDtypeStruct((B, T, D), jnp.float32),
                   jax.ShapeDtypeStruct((B, T, n_head * T), jnp.float32)),
        grid=grid,
        in_specs=[
            pl.BlockSpec((b_blk, T, D), lambda i: (i, 0, 0)),   # x
            resident((D, hk)), resident((1, hk)),               # Wq, bq
            resident((D, hk)), resident((1, hk)),               # Wk, bk
            resident((D, hv)), resident((1, hv)),               # Wv, bv
            resident((hv, D)), resident((1, D)),                # Wfc, bfc
        ],
        out_specs=(
            pl.BlockSpec((b_blk, T, D), lambda i: (i, 0, 0)),
            pl.BlockSpec((b_blk, T, n_head * T), lambda i: (i, 0, 0)),
        ),
        compiler_params=pltpu.CompilerParams(
            dimension_semantics=("parallel",),      # megacore-shardable on v7x
            vmem_limit_bytes=vmem_limit),
    )(x, wq, bq, wk, bk, wv, bv, wf, bf)

    # attn_raw: [B, T, n_head*T] -> torch layout (n_head*B, T, T), head-major.
    attn = (attn_raw.reshape(B, T, n_head, T)
                    .transpose(2, 0, 1, 3)
                    .reshape(n_head * B, T, T))
    return out, attn


def init_params(key, d_model, n_head, d_k, d_v):
    """Synthetic params. Weights stored pre-transposed to [in, out]; biases [1, out]."""
    ks = jax.random.split(key, 8)
    def w(k, fan_in, fan_out):
        return jax.random.normal(k, (fan_in, fan_out), jnp.float32) / math.sqrt(fan_in)
    def b(k, n):
        return jax.random.normal(k, (1, n), jnp.float32) * 0.02
    wq = w(ks[0], d_model, n_head * d_k); bq = b(ks[1], n_head * d_k)
    wk = w(ks[2], d_model, n_head * d_k); bk = b(ks[3], n_head * d_k)
    wv = w(ks[4], d_model, n_head * d_v); bv = b(ks[5], n_head * d_v)
    wf = w(ks[6], n_head * d_v, d_model); bf = b(ks[7], d_model)
    return (wq, bq, wk, bk, wv, bv, wf, bf)


def reference_forward(x, params, n_head, d_k, d_v):
    """Pure-JAX mirror of the torch module (mask=None, dropout=0)."""
    B, T, D = x.shape
    wq, bq, wk, bk, wv, bv, wf, bf = params

    def split_heads(t, dh):
        # [B, T, n_head*dh] -> view(B,T,H,dh).permute(2,0,1,3).view(H*B,T,dh)
        return (t.reshape(B, T, n_head, dh)
                 .transpose(2, 0, 1, 3)
                 .reshape(n_head * B, T, dh))

    q = split_heads(x @ wq + bq, d_k)
    k = split_heads(x @ wk + bk, d_k)
    v = split_heads(x @ wv + bv, d_v)

    attn = jnp.einsum('bqd,bkd->bqk', q, k) / math.sqrt(D)
    attn = jax.nn.softmax(attn, axis=-1)
    out = jnp.einsum('bqk,bkd->bqd', attn, v)

    out = (out.reshape(n_head, B, T, d_v)
              .transpose(1, 2, 0, 3)
              .reshape(B, T, n_head * d_v))
    out = out @ wf + bf
    return out + x, attn


if __name__ == "__main__":
    # Small shapes consistent with MultiHeadAttention(n_head, d_model, d_k, d_v)
    B, T, d_model, n_head, d_k, d_v = 2, 16, 32, 2, 16, 16

    key = jax.random.PRNGKey(0)
    kx, kp = jax.random.split(key)
    x = jax.random.normal(kx, (B, T, d_model), jnp.float32)
    params = init_params(kp, d_model, n_head, d_k, d_v)

    out, attn = mha_forward(x, params, n_head=n_head, d_k=d_k, d_v=d_v)
    out = jax.block_until_ready(out)
    attn = jax.block_until_ready(attn)

    ref_out, ref_attn = reference_forward(x, params, n_head, d_k, d_v)

    assert out.shape == (B, T, d_model)
    assert attn.shape == (n_head * B, T, T)
    assert jnp.allclose(out, ref_out, atol=5e-5, rtol=5e-5), "output mismatch vs reference"
    assert jnp.allclose(attn, ref_attn, atol=5e-5, rtol=5e-5), "attn mismatch vs reference"

    print("KERNEL_OK")
</pallas_src>

<mosaic_0001>
module attributes {stable_mosaic.version = 11 : i64} {
  func.func @mha_kernel(%arg0: i32, %arg1: memref<2x16x32xf32, #tpu.memory_space<vmem>>, %arg2: memref<32x32xf32, #tpu.memory_space<vmem>>, %arg3: memref<1x32xf32, #tpu.memory_space<vmem>>, %arg4: memref<32x32xf32, #tpu.memory_space<vmem>>, %arg5: memref<1x32xf32, #tpu.memory_space<vmem>>, %arg6: memref<32x32xf32, #tpu.memory_space<vmem>>, %arg7: memref<1x32xf32, #tpu.memory_space<vmem>>, %arg8: memref<32x32xf32, #tpu.memory_space<vmem>>, %arg9: memref<1x32xf32, #tpu.memory_space<vmem>>, %arg10: memref<2x16x32xf32, #tpu.memory_space<vmem>>, %arg11: memref<2x16x32xf32, #tpu.memory_space<vmem>>) attributes {dimension_semantics = [#tpu.dimension_semantics<parallel>], iteration_bounds = array<i64: 1>, scalar_prefetch = 0 : i64, scratch_operands = 0 : i64, tpu.core_type = #tpu.core_type<tc>, window_params = [{transform_indices = @transform_0, window_bounds = array<i64: 2, 16, 32>}, {pipeline_mode = #tpu.pipeline_mode<synchronous>, transform_indices = @transform_1, window_bounds = array<i64: 32, 32>}, {pipeline_mode = #tpu.pipeline_mode<synchronous>, transform_indices = @transform_2, window_bounds = array<i64: 1, 32>}, {pipeline_mode = #tpu.pipeline_mode<synchronous>, transform_indices = @transform_3, window_bounds = array<i64: 32, 32>}, {pipeline_mode = #tpu.pipeline_mode<synchronous>, transform_indices = @transform_4, window_bounds = array<i64: 1, 32>}, {pipeline_mode = #tpu.pipeline_mode<synchronous>, transform_indices = @transform_5, window_bounds = array<i64: 32, 32>}, {pipeline_mode = #tpu.pipeline_mode<synchronous>, transform_indices = @transform_6, window_bounds = array<i64: 1, 32>}, {pipeline_mode = #tpu.pipeline_mode<synchronous>, transform_indices = @transform_7, window_bounds = array<i64: 32, 32>}, {pipeline_mode = #tpu.pipeline_mode<synchronous>, transform_indices = @transform_8, window_bounds = array<i64: 1, 32>}, {transform_indices = @transform_9, window_bounds = array<i64: 2, 16, 32>}, {transform_indices = @transform_10, window_bounds = array<i64: 2, 16, 32>}]} {
    %c0 = arith.constant 0 : index
    %c0_0 = arith.constant 0 : index
    %c0_1 = arith.constant 0 : index
    %0 = vector.load %arg1[%c0, %c0_0, %c0_1] : memref<2x16x32xf32, #tpu.memory_space<vmem>>, vector<2x16x32xf32>
    %1 = vector.shape_cast %0 : vector<2x16x32xf32> to vector<32x32xf32>
    %c0_2 = arith.constant 0 : index
    %c0_3 = arith.constant 0 : index
    %2 = vector.load %arg2[%c0_2, %c0_3] : memref<32x32xf32, #tpu.memory_space<vmem>>, vector<32x32xf32>
    %cst = arith.constant dense<0.000000e+00> : vector<32x32xf32>
    %3 = tpu.matmul %1, %2, %cst {dimension_numbers = #tpu.dot_dimension_numbers<[1], [0], [0], [1], [0, 0, 1, 1], [], []>} : vector<32x32xf32>, vector<32x32xf32>, vector<32x32xf32> -> vector<32x32xf32>
    %c0_4 = arith.constant 0 : index
    %c0_5 = arith.constant 0 : index
    %4 = vector.load %arg3[%c0_4, %c0_5] : memref<1x32xf32, #tpu.memory_space<vmem>>, vector<1x32xf32>
    %5 = vector.broadcast %4 : vector<1x32xf32> to vector<32x32xf32>
    %6 = arith.addf %3, %5 : vector<32x32xf32>
    %cst_6 = arith.constant 0.176776692 : f32
    %7 = vector.broadcast %cst_6 : f32 to vector<32x32xf32>
    %8 = arith.mulf %6, %7 : vector<32x32xf32>
    %c0_7 = arith.constant 0 : index
    %c0_8 = arith.constant 0 : index
    %9 = vector.load %arg4[%c0_7, %c0_8] : memref<32x32xf32, #tpu.memory_space<vmem>>, vector<32x32xf32>
    %cst_9 = arith.constant dense<0.000000e+00> : vector<32x32xf32>
    %10 = tpu.matmul %1, %9, %cst_9 {dimension_numbers = #tpu.dot_dimension_numbers<[1], [0], [0], [1], [0, 0, 1, 1], [], []>} : vector<32x32xf32>, vector<32x32xf32>, vector<32x32xf32> -> vector<32x32xf32>
    %c0_10 = arith.constant 0 : index
    %c0_11 = arith.constant 0 : index
    %11 = vector.load %arg5[%c0_10, %c0_11] : memref<1x32xf32, #tpu.memory_space<vmem>>, vector<1x32xf32>
    %12 = vector.broadcast %11 : vector<1x32xf32> to vector<32x32xf32>
    %13 = arith.addf %10, %12 : vector<32x32xf32>
    %c0_12 = arith.constant 0 : index
    %c0_13 = arith.constant 0 : index
    %14 = vector.load %arg6[%c0_12, %c0_13] : memref<32x32xf32, #tpu.memory_space<vmem>>, vector<32x32xf32>
    %cst_14 = arith.constant dense<0.000000e+00> : vector<32x32xf32>
    %15 = tpu.matmul %1, %14, %cst_14 {dimension_numbers = #tpu.dot_dimension_numbers<[1], [0], [0], [1], [0, 0, 1, 1], [], []>} : vector<32x32xf32>, vector<32x32xf32>, vector<32x32xf32> -> vector<32x32xf32>
    %c0_15 = arith.constant 0 : index
    %c0_16 = arith.constant 0 : index
    %16 = vector.load %arg7[%c0_15, %c0_16] : memref<1x32xf32, #tpu.memory_space<vmem>>, vector<1x32xf32>
    %17 = vector.broadcast %16 : vector<1x32xf32> to vector<32x32xf32>
    %18 = arith.addf %15, %17 : vector<32x32xf32>
    %c0_17 = arith.constant 0 : index
    %c0_18 = arith.constant 0 : index
    %19 = vector.load %arg8[%c0_17, %c0_18] : memref<32x32xf32, #tpu.memory_space<vmem>>, vector<32x32xf32>
    %c0_19 = arith.constant 0 : index
    %c0_20 = arith.constant 0 : index
    %20 = vector.load %arg9[%c0_19, %c0_20] : memref<1x32xf32, #tpu.memory_space<vmem>>, vector<1x32xf32>
    %21 = vector.extract_strided_slice %8 {offsets = [0, 0], sizes = [16, 16], strides = [1, 1]} : vector<32x32xf32> to vector<16x16xf32>
    %22 = vector.extract_strided_slice %13 {offsets = [0, 0], sizes = [16, 16], strides = [1, 1]} : vector<32x32xf32> to vector<16x16xf32>
    %23 = vector.extract_strided_slice %18 {offsets = [0, 0], sizes = [16, 16], strides = [1, 1]} : vector<32x32xf32> to vector<16x16xf32>
    %cst_21 = arith.constant dense<0.000000e+00> : vector<16x16xf32>
    %24 = tpu.matmul %21, %22, %cst_21 {dimension_numbers = #tpu.dot_dimension_numbers<[1], [1], [0], [0], [0, 0, 1, 0], [], []>} : vector<16x16xf32>, vector<16x16xf32>, vector<16x16xf32> -> vector<16x16xf32>
    %cst_22 = arith.constant dense<0xFF800000> : vector<16xf32>
    %25 = vector.multi_reduction <maximumf>, %24, %cst_22 [1] : vector<16x16xf32> to vector<16xf32>
    %26 = vector.shape_cast %25 : vector<16xf32> to vector<16x1xf32>
    %27 = vector.broadcast %26 : vector<16x1xf32> to vector<16x16xf32>
    %28 = arith.subf %24, %27 : vector<16x16xf32>
    %29 = math.exp %28 : vector<16x16xf32>
    %cst_23 = arith.constant dense<0.000000e+00> : vector<16xf32>
    %30 = vector.multi_reduction <add>, %29, %cst_23 [1] : vector<16x16xf32> to vector<16xf32>
    %31 = vector.shape_cast %30 : vector<16xf32> to vector<16x1xf32>
    %32 = tpu.reciprocal %31 : vector<16x1xf32> -> vector<16x1xf32>
    %33 = vector.broadcast %32 : vector<16x1xf32> to vector<16x16xf32>
    %34 = arith.mulf %29, %33 : vector<16x16xf32>
    %cst_24 = arith.constant dense<0.000000e+00> : vector<16x16xf32>
    %35 = tpu.matmul %34, %23, %cst_24 {dimension_numbers = #tpu.dot_dimension_numbers<[1], [0], [0], [1], [0, 0, 1, 1], [], []>} : vector<16x16xf32>, vector<16x16xf32>, vector<16x16xf32> -> vector<16x16xf32>
    %36 = vector.extract_strided_slice %19 {offsets = [0, 0], sizes = [16, 32], strides = [1, 1]} : vector<32x32xf32> to vector<16x32xf32>
    %cst_25 = arith.constant dense<0.000000e+00> : vector<16x32xf32>
    %37 = tpu.matmul %35, %36, %cst_25 {dimension_numbers = #tpu.dot_dimension_numbers<[1], [0], [0], [1], [0, 0, 1, 1], [], []>} : vector<16x16xf32>, vector<16x32xf32>, vector<16x32xf32> -> vector<16x32xf32>
    %38 = vector.extract_strided_slice %8 {offsets = [0, 16], sizes = [16, 16], strides = [1, 1]} : vector<32x32xf32> to vector<16x16xf32>
    %39 = vector.extract_strided_slice %13 {offsets = [0, 16], sizes = [16, 16], strides = [1, 1]} : vector<32x32xf32> to vector<16x16xf32>
    %40 = vector.extract_strided_slice %18 {offsets = [0, 16], sizes = [16, 16], strides = [1, 1]} : vector<32x32xf32> to vector<16x16xf32>
    %cst_26 = arith.constant dense<0.000000e+00> : vector<16x16xf32>
    %41 = tpu.matmul %38, %39, %cst_26 {dimension_numbers = #tpu.dot_dimension_numbers<[1], [1], [0], [0], [0, 0, 1, 0], [], []>} : vector<16x16xf32>, vector<16x16xf32>, vector<16x16xf32> -> vector<16x16xf32>
    %cst_27 = arith.constant dense<0xFF800000> : vector<16xf32>
    %42 = vector.multi_reduction <maximumf>, %41, %cst_27 [1] : vector<16x16xf32> to vector<16xf32>
    %43 = vector.shape_cast %42 : vector<16xf32> to vector<16x1xf32>
    %44 = vector.broadcast %43 : vector<16x1xf32> to vector<16x16xf32>
    %45 = arith.subf %41, %44 : vector<16x16xf32>
    %46 = math.exp %45 : vector<16x16xf32>
    %cst_28 = arith.constant dense<0.000000e+00> : vector<16xf32>
    %47 = vector.multi_reduction <add>, %46, %cst_28 [1] : vector<16x16xf32> to vector<16xf32>
    %48 = vector.shape_cast %47 : vector<16xf32> to vector<16x1xf32>
    %49 = tpu.reciprocal %48 : vector<16x1xf32> -> vector<16x1xf32>
    %50 = vector.broadcast %49 : vector<16x1xf32> to vector<16x16xf32>
    %51 = arith.mulf %46, %50 : vector<16x16xf32>
    %cst_29 = arith.constant dense<0.000000e+00> : vector<16x16xf32>
    %52 = tpu.matmul %51, %40, %cst_29 {dimension_numbers = #tpu.dot_dimension_numbers<[1], [0], [0], [1], [0, 0, 1, 1], [], []>} : vector<16x16xf32>, vector<16x16xf32>, vector<16x16xf32> -> vector<16x16xf32>
    %53 = vector.extract_strided_slice %19 {offsets = [16, 0], sizes = [16, 32], strides = [1, 1]} : vector<32x32xf32> to vector<16x32xf32>
    %cst_30 = arith.constant dense<0.000000e+00> : vector<16x32xf32>
    %54 = tpu.matmul %52, %53, %cst_30 {dimension_numbers = #tpu.dot_dimension_numbers<[1], [0], [0], [1], [0, 0, 1, 1], [], []>} : vector<16x16xf32>, vector<16x32xf32>, vector<16x32xf32> -> vector<16x32xf32>
    %55 = arith.addf %37, %54 : vector<16x32xf32>
    %56 = tpu.concatenate %34, %51 in 1 : vector<16x16xf32>, vector<16x16xf32> -> vector<16x32xf32>
    %c0_31 = arith.constant 0 : index
    %c0_32 = arith.constant 0 : index
    %c0_33 = arith.constant 0 : index
    %57 = vector.load %arg11[%c0_31, %c0_32, %c0_33] : memref<2x16x32xf32, #tpu.memory_space<vmem>>, vector<1x16x32xf32>
    %58 = vector.shape_cast %57 : vector<1x16x32xf32> to vector<16x32xf32>
    %59 = vector.shape_cast %56 : vector<16x32xf32> to vector<1x16x32xf32>
    tpu.vector_store %arg11[%c0_31, %c0_32, %c0_33], %59 {strides = array<i32>} : memref<2x16x32xf32, #tpu.memory_space<vmem>>, vector<1x16x32xf32>,
    %60 = vector.broadcast %20 : vector<1x32xf32> to vector<16x32xf32>
    %61 = arith.addf %55, %60 : vector<16x32xf32>
    %62 = vector.extract_strided_slice %0 {offsets = [0, 0, 0], sizes = [1, 16, 32], strides = [1, 1, 1]} : vector<2x16x32xf32> to vector<1x16x32xf32>
    %63 = vector.shape_cast %62 : vector<1x16x32xf32> to vector<16x32xf32>
    %64 = arith.addf %61, %63 : vector<16x32xf32>
    %c0_34 = arith.constant 0 : index
    %c0_35 = arith.constant 0 : index
    %c0_36 = arith.constant 0 : index
    %65 = vector.load %arg10[%c0_34, %c0_35, %c0_36] : memref<2x16x32xf32, #tpu.memory_space<vmem>>, vector<1x16x32xf32>
    %66 = vector.shape_cast %65 : vector<1x16x32xf32> to vector<16x32xf32>
    %67 = vector.shape_cast %64 : vector<16x32xf32> to vector<1x16x32xf32>
    tpu.vector_store %arg10[%c0_34, %c0_35, %c0_36], %67 {strides = array<i32>} : memref<2x16x32xf32, #tpu.memory_space<vmem>>, vector<1x16x32xf32>,
    %68 = vector.extract_strided_slice %8 {offsets = [16, 0], sizes = [16, 16], strides = [1, 1]} : vector<32x32xf32> to vector<16x16xf32>
    %69 = vector.extract_strided_slice %13 {offsets = [16, 0], sizes = [16, 16], strides = [1, 1]} : vector<32x32xf32> to vector<16x16xf32>
    %70 = vector.extract_strided_slice %18 {offsets = [16, 0], sizes = [16, 16], strides = [1, 1]} : vector<32x32xf32> to vector<16x16xf32>
    %cst_37 = arith.constant dense<0.000000e+00> : vector<16x16xf32>
    %71 = tpu.matmul %68, %69, %cst_37 {dimension_numbers = #tpu.dot_dimension_numbers<[1], [1], [0], [0], [0, 0, 1, 0], [], []>} : vector<16x16xf32>, vector<16x16xf32>, vector<16x16xf32> -> vector<16x16xf32>
    %cst_38 = arith.constant dense<0xFF800000> : vector<16xf32>
    %72 = vector.multi_reduction <maximumf>, %71, %cst_38 [1] : vector<16x16xf32> to vector<16xf32>
    %73 = vector.shape_cast %72 : vector<16xf32> to vector<16x1xf32>
    %74 = vector.broadcast %73 : vector<16x1xf32> to vector<16x16xf32>
    %75 = arith.subf %71, %74 : vector<16x16xf32>
    %76 = math.exp %75 : vector<16x16xf32>
    %cst_39 = arith.constant dense<0.000000e+00> : vector<16xf32>
    %77 = vector.multi_reduction <add>, %76, %cst_39 [1] : vector<16x16xf32> to vector<16xf32>
    %78 = vector.shape_cast %77 : vector<16xf32> to vector<16x1xf32>
    %79 = tpu.reciprocal %78 : vector<16x1xf32> -> vector<16x1xf32>
    %80 = vector.broadcast %79 : vector<16x1xf32> to vector<16x16xf32>
    %81 = arith.mulf %76, %80 : vector<16x16xf32>
    %cst_40 = arith.constant dense<0.000000e+00> : vector<16x16xf32>
    %82 = tpu.matmul %81, %70, %cst_40 {dimension_numbers = #tpu.dot_dimension_numbers<[1], [0], [0], [1], [0, 0, 1, 1], [], []>} : vector<16x16xf32>, vector<16x16xf32>, vector<16x16xf32> -> vector<16x16xf32>
    %83 = vector.extract_strided_slice %19 {offsets = [0, 0], sizes = [16, 32], strides = [1, 1]} : vector<32x32xf32> to vector<16x32xf32>
    %cst_41 = arith.constant dense<0.000000e+00> : vector<16x32xf32>
    %84 = tpu.matmul %82, %83, %cst_41 {dimension_numbers = #tpu.dot_dimension_numbers<[1], [0], [0], [1], [0, 0, 1, 1], [], []>} : vector<16x16xf32>, vector<16x32xf32>, vector<16x32xf32> -> vector<16x32xf32>
    %85 = vector.extract_strided_slice %8 {offsets = [16, 16], sizes = [16, 16], strides = [1, 1]} : vector<32x32xf32> to vector<16x16xf32>
    %86 = vector.extract_strided_slice %13 {offsets = [16, 16], sizes = [16, 16], strides = [1, 1]} : vector<32x32xf32> to vector<16x16xf32>
    %87 = vector.extract_strided_slice %18 {offsets = [16, 16], sizes = [16, 16], strides = [1, 1]} : vector<32x32xf32> to vector<16x16xf32>
    %cst_42 = arith.constant dense<0.000000e+00> : vector<16x16xf32>
    %88 = tpu.matmul %85, %86, %cst_42 {dimension_numbers = #tpu.dot_dimension_numbers<[1], [1], [0], [0], [0, 0, 1, 0], [], []>} : vector<16x16xf32>, vector<16x16xf32>, vector<16x16xf32> -> vector<16x16xf32>
    %cst_43 = arith.constant dense<0xFF800000> : vector<16xf32>
    %89 = vector.multi_reduction <maximumf>, %88, %cst_43 [1] : vector<16x16xf32> to vector<16xf32>
    %90 = vector.shape_cast %89 : vector<16xf32> to vector<16x1xf32>
    %91 = vector.broadcast %90 : vector<16x1xf32> to vector<16x16xf32>
    %92 = arith.subf %88, %91 : vector<16x16xf32>
    %93 = math.exp %92 : vector<16x16xf32>
    %cst_44 = arith.constant dense<0.000000e+00> : vector<16xf32>
    %94 = vector.multi_reduction <add>, %93, %cst_44 [1] : vector<16x16xf32> to vector<16xf32>
    %95 = vector.shape_cast %94 : vector<16xf32> to vector<16x1xf32>
    %96 = tpu.reciprocal %95 : vector<16x1xf32> -> vector<16x1xf32>
    %97 = vector.broadcast %96 : vector<16x1xf32> to vector<16x16xf32>
    %98 = arith.mulf %93, %97 : vector<16x16xf32>
    %cst_45 = arith.constant dense<0.000000e+00> : vector<16x16xf32>
    %99 = tpu.matmul %98, %87, %cst_45 {dimension_numbers = #tpu.dot_dimension_numbers<[1], [0], [0], [1], [0, 0, 1, 1], [], []>} : vector<16x16xf32>, vector<16x16xf32>, vector<16x16xf32> -> vector<16x16xf32>
    %100 = vector.extract_strided_slice %19 {offsets = [16, 0], sizes = [16, 32], strides = [1, 1]} : vector<32x32xf32> to vector<16x32xf32>
    %cst_46 = arith.constant dense<0.000000e+00> : vector<16x32xf32>
    %101 = tpu.matmul %99, %100, %cst_46 {dimension_numbers = #tpu.dot_dimension_numbers<[1], [0], [0], [1], [0, 0, 1, 1], [], []>} : vector<16x16xf32>, vector<16x32xf32>, vector<16x32xf32> -> vector<16x32xf32>
    %102 = arith.addf %84, %101 : vector<16x32xf32>
    %103 = tpu.concatenate %81, %98 in 1 : vector<16x16xf32>, vector<16x16xf32> -> vector<16x32xf32>
    %c1 = arith.constant 1 : index
    %c0_47 = arith.constant 0 : index
    %c0_48 = arith.constant 0 : index
    %104 = vector.load %arg11[%c1, %c0_47, %c0_48] : memref<2x16x32xf32, #tpu.memory_space<vmem>>, vector<1x16x32xf32>
    %105 = vector.shape_cast %104 : vector<1x16x32xf32> to vector<16x32xf32>
    %106 = vector.shape_cast %103 : vector<16x32xf32> to vector<1x16x32xf32>
    tpu.vector_store %arg11[%c1, %c0_47, %c0_48], %106 {strides = array<i32>} : memref<2x16x32xf32, #tpu.memory_space<vmem>>, vector<1x16x32xf32>,
    %107 = vector.broadcast %20 : vector<1x32xf32> to vector<16x32xf32>
    %108 = arith.addf %102, %107 : vector<16x32xf32>
    %109 = vector.extract_strided_slice %0 {offsets = [1, 0, 0], sizes = [1, 16, 32], strides = [1, 1, 1]} : vector<2x16x32xf32> to vector<1x16x32xf32>
    %110 = vector.shape_cast %109 : vector<1x16x32xf32> to vector<16x32xf32>
    %111 = arith.addf %108, %110 : vector<16x32xf32>
    %c1_49 = arith.constant 1 : index
    %c0_50 = arith.constant 0 : index
    %c0_51 = arith.constant 0 : index
    %112 = vector.load %arg10[%c1_49, %c0_50, %c0_51] : memref<2x16x32xf32, #tpu.memory_space<vmem>>, vector<1x16x32xf32>
    %113 = vector.shape_cast %112 : vector<1x16x32xf32> to vector<16x32xf32>
    %114 = vector.shape_cast %111 : vector<16x32xf32> to vector<1x16x32xf32>
    tpu.vector_store %arg10[%c1_49, %c0_50, %c0_51], %114 {strides = array<i32>} : memref<2x16x32xf32, #tpu.memory_space<vmem>>, vector<1x16x32xf32>,
    return
  }
  func.func @transform_0(%arg0: i32) -> (i32, i32, i32) {
    %c0_i32 = arith.constant 0 : i32
    %c0_i32_0 = arith.constant 0 : i32
    %c0_i32_1 = arith.constant 0 : i32
    return %arg0, %c0_i32, %c0_i32_0 : i32, i32, i32
  }
  func.func @transform_1(%arg0: i32) -> (i32, i32) {
    %c0_i32 = arith.constant 0 : i32
    %c0_i32_0 = arith.constant 0 : i32
    %c0_i32_1 = arith.constant 0 : i32
    return %c0_i32, %c0_i32_0 : i32, i32
  }
  func.func @transform_2(%arg0: i32) -> (i32, i32) {
    %c0_i32 = arith.constant 0 : i32
    %c0_i32_0 = arith.constant 0 : i32
    %c0_i32_1 = arith.constant 0 : i32
    return %c0_i32, %c0_i32_0 : i32, i32
  }
  func.func @transform_3(%arg0: i32) -> (i32, i32) {
    %c0_i32 = arith.constant 0 : i32
    %c0_i32_0 = arith.constant 0 : i32
    %c0_i32_1 = arith.constant 0 : i32
    return %c0_i32, %c0_i32_0 : i32, i32
  }
  func.func @transform_4(%arg0: i32) -> (i32, i32) {
    %c0_i32 = arith.constant 0 : i32
    %c0_i32_0 = arith.constant 0 : i32
    %c0_i32_1 = arith.constant 0 : i32
    return %c0_i32, %c0_i32_0 : i32, i32
  }
  func.func @transform_5(%arg0: i32) -> (i32, i32) {
    %c0_i32 = arith.constant 0 : i32
    %c0_i32_0 = arith.constant 0 : i32
    %c0_i32_1 = arith.constant 0 : i32
    return %c0_i32, %c0_i32_0 : i32, i32
  }
  func.func @transform_6(%arg0: i32) -> (i32, i32) {
    %c0_i32 = arith.constant 0 : i32
    %c0_i32_0 = arith.constant 0 : i32
    %c0_i32_1 = arith.constant 0 : i32
    return %c0_i32, %c0_i32_0 : i32, i32
  }
  func.func @transform_7(%arg0: i32) -> (i32, i32) {
    %c0_i32 = arith.constant 0 : i32
    %c0_i32_0 = arith.constant 0 : i32
    %c0_i32_1 = arith.constant 0 : i32
    return %c0_i32, %c0_i32_0 : i32, i32
  }
  func.func @transform_8(%arg0: i32) -> (i32, i32) {
    %c0_i32 = arith.constant 0 : i32
    %c0_i32_0 = arith.constant 0 : i32
    %c0_i32_1 = arith.constant 0 : i32
    return %c0_i32, %c0_i32_0 : i32, i32
  }
  func.func @transform_9(%arg0: i32) -> (i32, i32, i32) {
    %c0_i32 = arith.constant 0 : i32
    %c0_i32_0 = arith.constant 0 : i32
    %c0_i32_1 = arith.constant 0 : i32
    return %arg0, %c0_i32, %c0_i32_0 : i32, i32, i32
  }
  func.func @transform_10(%arg0: i32) -> (i32, i32, i32) {
    %c0_i32 = arith.constant 0 : i32
    %c0_i32_0 = arith.constant 0 : i32
    %c0_i32_1 = arith.constant 0 : i32
    return %arg0, %c0_i32, %c0_i32_0 : i32, i32, i32
  }
}

</mosaic_0001>

<llo_original>
// kernel: mha_forward.1
$region0: #{mha_forward.1}
  #allocation0 [shape = 'u32[]', space=smem, size = 0x4, offset = 0x4, fixed_abs, tag = 'smem constant byte address 0x4 - core index']
  #allocation1 [shape = 'u32[144,128]{1,0:T(1,128)}', space=vmem, size = 0x12000, scoped, tag = 'internal scratch']
  %s0 = inlined_call_operand.hbm [shape: f32[2,16,32], index: 0, kind: input, shape index: {}]
  %s1 = inlined_call_operand.hbm [shape: f32[32,32], index: 1, kind: input, shape index: {}]
  %s2 = inlined_call_operand.vmem [shape: f32[1,32], index: 2, kind: input, shape index: {}]
  %s3 = inlined_call_operand.hbm [shape: f32[32,32], index: 3, kind: input, shape index: {}]
  %s4 = inlined_call_operand.vmem [shape: f32[1,32], index: 4, kind: input, shape index: {}]
  %s5 = inlined_call_operand.hbm [shape: f32[32,32], index: 5, kind: input, shape index: {}]
  %s6 = inlined_call_operand.vmem [shape: f32[1,32], index: 6, kind: input, shape index: {}]
  %s7 = inlined_call_operand.hbm [shape: f32[32,32], index: 7, kind: input, shape index: {}]
  %s8 = inlined_call_operand.vmem [shape: f32[1,32], index: 8, kind: input, shape index: {}]
  %s9 = inlined_call_operand.hbm [shape: f32[2,16,32], index: 9, kind: output, shape index: {0}]
  %s10 = inlined_call_operand.vmem [shape: f32[2,16,32], index: 10, kind: output, shape index: {1}]
  %11 = xla_tuple %s9, %s10
  %s12 = sld [smem:[#allocation0]]
  $region74: #{mha_forward.1} parent=0
    _
  %s14 = ssub.s32 1, %s12
  %s15 = scalar_select 0, %s14, %s12
  $region1: #{mha_forward.1} parent=0
    #allocation2 [shape = 'u8[16384]{0}', space=vmem, size = 0x4000, scoped, tag = 'input window, operand 0, single buffered']
    #allocation3 [shape = 's32[1]{0}', space=sflag, size = 0x4, scoped, tag = 'scoped memory for mha_forward.1']
    #allocation4 [shape = 's32[1]{0}', space=sflag, size = 0x4, scoped, tag = 'scoped memory for mha_forward.1']
    #allocation5 [shape = 'u8[16384]{0}', space=vmem, size = 0x4000, scoped, tag = 'input window, operand 1, single buffered']
    #allocation6 [shape = 's32[1]{0}', space=sflag, size = 0x4, scoped, tag = 'scoped memory for mha_forward.1']
    #allocation7 [shape = 'u8[16384]{0}', space=vmem, size = 0x4000, scoped, tag = 'input window, operand 3, single buffered']
    #allocation8 [shape = 'u8[16384]{0}', space=vmem, size = 0x4000, scoped, tag = 'input window, operand 5, single buffered']
    #allocation9 [shape = 's32[1]{0}', space=sflag, size = 0x4, scoped, tag = 'scoped memory for mha_forward.1']
    #allocation10 [shape = 'u8[16384]{0}', space=vmem, size = 0x4000, scoped, tag = 'input window, operand 7, single buffered']
    #allocation11 [shape = 'u8[16384]{0}', space=vmem, size = 0x4000, scoped, tag = 'output window, operand 0, single buffered']
    %16 = vsyncpa [#allocation3], 0
    %17 = vsyncpa [#allocation6], 0
    %18 = vsyncpa [#allocation9], 0
    %19 = vsyncpa [#allocation4], 0
    // Predicated region
    $region2: #{mha_forward.1} parent=1 // pred_check
      _
    $region3: #{mha_forward.1} parent=1 // pred_check_branch
      %21 = sbr.rel (0) target = $region5
    $region4: #{mha_forward.1} parent=1 // pred_region
      %s23 = ssub.s32 512, 512
      %24 = vsyncadd [#allocation3], %s23
      %s25 = sshll.u32 [#allocation2], 4
      %s26 = int_to_ptr.vmem [resolvable:$true] %s25
      %31 = dma.hbm_to_vmem [thread:$0]  %s0, 512, %s26, [#allocation3], 128, 128, 8
    $region5: #{mha_forward.1} parent=1 // pred_fallthru
      _
    // Predicated region
    $region6: #{mha_forward.1} parent=1 // pred_check
      _
    $region7: #{mha_forward.1} parent=1 // pred_check_branch
      %33 = sbr.rel (0) target = $region9
    $region8: #{mha_forward.1} parent=1 // pred_region
      %s35 = ssub.s32 512, 512
      %36 = vsyncadd [#allocation6], %s35
      %s37 = sshll.u32 [#allocation5], 4
      %s38 = int_to_ptr.vmem [resolvable:$true] %s37
      %43 = dma.hbm_to_vmem [thread:$0]  %s1, 512, %s38, [#allocation6], 128, 128, 8
    $region9: #{mha_forward.1} parent=1 // pred_fallthru
      _
    // Predicated region
    $region10: #{mha_forward.1} parent=1 // pred_check
      _
    $region11: #{mha_forward.1} parent=1 // pred_check_branch
      %45 = sbr.rel (0) target = $region13
    $region12: #{mha_forward.1} parent=1 // pred_region
      _
    $region13: #{mha_forward.1} parent=1 // pred_fallthru
      _
    // Predicated region
    $region14: #{mha_forward.1} parent=1 // pred_check
      _
    $region15: #{mha_forward.1} parent=1 // pred_check_branch
      %47 = sbr.rel (0) target = $region17
    $region16: #{mha_forward.1} parent=1 // pred_region
      %s49 = ssub.s32 512, 512
      %50 = vsyncadd [#allocation6], %s49
      %s51 = sshll.u32 [#allocation7], 4
      %s52 = int_to_ptr.vmem [resolvable:$true] %s51
      %57 = dma.hbm_to_vmem [thread:$0]  %s3, 512, %s52, [#allocation6], 128, 128, 8
    $region17: #{mha_forward.1} parent=1 // pred_fallthru
      _
    // Predicated region
    $region18: #{mha_forward.1} parent=1 // pred_check
      _
    $region19: #{mha_forward.1} parent=1 // pred_check_branch
      %59 = sbr.rel (0) target = $region21
    $region20: #{mha_forward.1} parent=1 // pred_region
      _
    $region21: #{mha_forward.1} parent=1 // pred_fallthru
      _
    // Predicated region
    $region22: #{mha_forward.1} parent=1 // pred_check
      _
    $region23: #{mha_forward.1} parent=1 // pred_check_branch
      %61 = sbr.rel (0) target = $region25
    $region24: #{mha_forward.1} parent=1 // pred_region
      %s63 = ssub.s32 512, 512
      %64 = vsyncadd [#allocation9], %s63
      %s65 = sshll.u32 [#allocation8], 4
      %s66 = int_to_ptr.vmem [resolvable:$true] %s65
      %71 = dma.hbm_to_vmem [thread:$0]  %s5, 512, %s66, [#allocation9], 128, 128, 8
    $region25: #{mha_forward.1} parent=1 // pred_fallthru
      _
    // Predicated region
    $region26: #{mha_forward.1} parent=1 // pred_check
      _
    $region27: #{mha_forward.1} parent=1 // pred_check_branch
      %73 = sbr.rel (0) target = $region29
    $region28: #{mha_forward.1} parent=1 // pred_region
      _
    $region29: #{mha_forward.1} parent=1 // pred_fallthru
      _
    // Predicated region
    $region30: #{mha_forward.1} parent=1 // pred_check
      _
    $region31: #{mha_forward.1} parent=1 // pred_check_branch
      %75 = sbr.rel (0) target = $region33
    $region32: #{mha_forward.1} parent=1 // pred_region
      %s77 = ssub.s32 512, 512
      %78 = vsyncadd [#allocation9], %s77
      %s79 = sshll.u32 [#allocation10], 4
      %s80 = int_to_ptr.vmem [resolvable:$true] %s79
      %85 = dma.hbm_to_vmem [thread:$0]  %s7, 512, %s80, [#allocation9], 128, 128, 8
    $region33: #{mha_forward.1} parent=1 // pred_fallthru
      _
    // Predicated region
    $region34: #{mha_forward.1} parent=1 // pred_check
      _
    $region35: #{mha_forward.1} parent=1 // pred_check_branch
      %87 = sbr.rel (0) target = $region37
    $region36: #{mha_forward.1} parent=1 // pred_region
      _
    $region37: #{mha_forward.1} parent=1 // pred_fallthru
      _
    // Predicated region
    $region38: #{mha_forward.1} parent=1 // pred_check
      _
    $region39: #{mha_forward.1} parent=1 // pred_check_branch
      %89 = sbr.rel (0) target = $region41
    $region40: #{mha_forward.1} parent=1 // pred_region
      %90 = dma.done [#allocation3], 512
    $region41: #{mha_forward.1} parent=1 // pred_fallthru
      _
    // Predicated region
    $region42: #{mha_forward.1} parent=1 // pred_check
      _
    $region43: #{mha_forward.1} parent=1 // pred_check_branch
      %92 = sbr.rel (0) target = $region45
    $region44: #{mha_forward.1} parent=1 // pred_region
      %93 = dma.done [#allocation6], 512
    $region45: #{mha_forward.1} parent=1 // pred_fallthru
      _
    // Predicated region
    $region46: #{mha_forward.1} parent=1 // pred_check
      _
    $region47: #{mha_forward.1} parent=1 // pred_check_branch
      %95 = sbr.rel (0) target = $region49
    $region48: #{mha_forward.1} parent=1 // pred_region
      %96 = dma.done [#allocation6], 512
    $region49: #{mha_forward.1} parent=1 // pred_fallthru
      _
    // Predicated region
    $region50: #{mha_forward.1} parent=1 // pred_check
      _
    $region51: #{mha_forward.1} parent=1 // pred_check_branch
      %98 = sbr.rel (0) target = $region53
    $region52: #{mha_forward.1} parent=1 // pred_region
      %99 = dma.done [#allocation9], 512
    $region53: #{mha_forward.1} parent=1 // pred_fallthru
      _
    // Predicated region
    $region54: #{mha_forward.1} parent=1 // pred_check
      _
    $region55: #{mha_forward.1} parent=1 // pred_check_branch
      %101 = sbr.rel (0) target = $region57
    $region56: #{mha_forward.1} parent=1 // pred_region
      %102 = dma.done [#allocation9], 512
    $region57: #{mha_forward.1} parent=1 // pred_fallthru
      _
    %v103 = vld [vmem:[#allocation2] sm:$0xff]
    %v104 = vld [vmem:[#allocation2 + $0x8] sm:$0xff]
    %v105 = vld [vmem:[#allocation2 + $0x10] sm:$0xff]
    %v106 = vld [vmem:[#allocation2 + $0x18] sm:$0xff]
    %v107 = vld [vmem:[#allocation5] sm:$0xff]
    %v108 = vld [vmem:[#allocation5 + $0x8] sm:$0xff]
    %v109 = vld [vmem:[#allocation5 + $0x10] sm:$0xff]
    %v110 = vld [vmem:[#allocation5 + $0x18] sm:$0xff]
    %v111 = vld [vmem:[%s2] sm:$0x1]
    %v113 = vlaneseq
    %v114 = vshrl.u32 %v113, 7
    %v115 = vsub.s32 0, %v114
    %v116 = vrot.slane %v111, %v115
    %vm118 = vcmask 261120
    %v120 = vsel %vm118, %v103, 0
    %v123 = vsel %vm118, %v104, 0
    %v126 = vsel %vm118, %v105, 0
    %v129 = vsel %vm118, %v106, 0
    %131 = vmatprep.subr.mxu0 0.0
    %132 = vmatpush1.msra.mxu0 %v107
    %133 = vmatprep.subr.mxu0 0.0
    %134 = vmatpush1.msra.mxu0 %v108
    %135 = vmatprep.subr.mxu0 0.0
    %136 = vmatpush1.msra.mxu0 %v109
    %137 = vmatprep.subr.mxu0 0.0
    %138 = vmatpush1.msra.mxu0 %v110
    %139 = vmatprep.subr.mxu0 0.0
    %140 = vmatpush1.msra.mxu0 0.0
    %141 = vmatprep.subr.mxu0 0.0
    %142 = vmatpush1.msra.mxu0 0.0
    %143 = vmatprep.subr.mxu0 0.0
    %144 = vmatpush1.msra.mxu0 0.0
    %145 = vmatprep.subr.mxu0 0.0
    %146 = vmatpush1.msra.mxu0 0.0
    %147 = vmatprep.subr.mxu0 0.0
    %148 = vmatpush1.msra.mxu0 0.0
    %149 = vmatprep.subr.mxu0 0.0
    %150 = vmatpush1.msra.mxu0 0.0
    %151 = vmatprep.subr.mxu0 0.0
    %152 = vmatpush1.msra.mxu0 0.0
    %153 = vmatprep.subr.mxu0 0.0
    %154 = vmatpush1.msra.mxu0 0.0
    %155 = vmatprep.subr.mxu0 0.0
    %156 = vmatpush1.msra.mxu0 0.0
    %157 = vmatprep.subr.mxu0 0.0
    %158 = vmatpush1.msra.mxu0 0.0
    %159 = vmatprep.subr.mxu0 0.0
    %160 = vmatpush1.msra.mxu0 0.0
    %161 = vmatprep.subr.mxu0 0.0
    %162 = vmatpush1.msra.mxu0 0.0
    %163 = vmatprep.subr.mxu0 0.0
    %164 = vmatpush1.msra.mxu0 0.0
    %165 = vmatprep.subr.mxu0 0.0
    %166 = vmatpush1.msra.mxu0 0.0
    %167 = vmatprep.subr.mxu0 0.0
    %168 = vmatpush1.msra.mxu0 0.0
    %169 = vmatprep.subr.mxu0 0.0
    %170 = vmatpush1.msra.mxu0 0.0
    %171 = vmatprep.subr.mxu0 0.0
    %172 = vmatpush1.msra.mxu0 0.0
    %173 = vmatprep.subr.mxu0 0.0
    %174 = vmatpush1.msra.mxu0 0.0
    %175 = vmatprep.subr.mxu0 0.0
    %176 = vmatpush1.msra.mxu0 0.0
    %177 = vmatprep.subr.mxu0 0.0
    %178 = vmatpush1.msra.mxu0 0.0
    %179 = vmatprep.subr.mxu0 0.0
    %180 = vmatpush1.msra.mxu0 0.0
    %181 = vmatprep.subr.mxu0 0.0
    %182 = vmatpush1.msra.mxu0 0.0
    %183 = vmatprep.subr.mxu0 0.0
    %184 = vmatpush1.msra.mxu0 0.0
    %185 = vmatprep.subr.mxu0 0.0
    %186 = vmatpush1.msra.mxu0 0.0
    %187 = vmatprep.subr.mxu0 0.0
    %188 = vmatpush1.msra.mxu0 0.0
    %189 = vmatprep.subr.mxu0 0.0
    %190 = vmatpush1.msra.mxu0 0.0
    %191 = vmatprep.subr.mxu0 0.0
    %192 = vmatpush1.msra.mxu0 0.0
    %193 = vmatprep.subr.mxu0 0.0
    %194 = vmatpush1.msra.mxu0 0.0
    %195 = vmatprep.mubr.f32.mxu0 0.0
    %196 = vmatmul.mubr.f32.gmra.mrb[0].mxu0 %v120
    %v197 = vpop.f32.mrb[0].mxu0
    %v198 = vadd.f32 %v116, %v197
    %v199 = vpop.f32.mrb[0].mxu0
    %200 = vmatprep.mubr.f32.mxu0 0.0
    %201 = vmatmul.mubr.f32.gmra.mrb[0].mxu0 %v123
    %v202 = vpop.f32.mrb[0].mxu0
    %v203 = vadd.f32 %v116, %v202
    %v204 = vpop.f32.mrb[0].mxu0
    %205 = vmatprep.mubr.f32.mxu0 0.0
    %206 = vmatmul.mubr.f32.gmra.mrb[0].mxu0 %v126
    %v207 = vpop.f32.mrb[0].mxu0
    %v208 = vadd.f32 %v116, %v207
    %v209 = vpop.f32.mrb[0].mxu0
    %210 = vmatprep.mubr.f32.mxu0 0.0
    %211 = vmatmul.mubr.f32.gmra.mrb[0].mxu0 %v129
    %v212 = vpop.f32.mrb[0].mxu0
    %v213 = vadd.f32 %v116, %v212
    %v214 = vpop.f32.mrb[0].mxu0
    %215 = vdwg.mxu0
    %v216 = vmul.f32 %v198, 0.17677669
    %v217 = vmul.f32 %v203, 0.17677669
    %v218 = vmul.f32 %v208, 0.17677669
    %v219 = vmul.f32 %v213, 0.17677669
    %v220 = vld [vmem:[#allocation7] sm:$0xff]
    %v221 = vld [vmem:[#allocation7 + $0x8] sm:$0xff]
    %v222 = vld [vmem:[#allocation7 + $0x10] sm:$0xff]
    %v223 = vld [vmem:[#allocation7 + $0x18] sm:$0xff]
    %v224 = vld [vmem:[%s4] sm:$0x1]
    %v226 = vlaneseq
    %v227 = vshrl.u32 %v226, 7
    %v228 = vsub.s32 0, %v227
    %v229 = vrot.slane %v224, %v228
    %231 = vmatprep.subr.mxu0 0.0
    %232 = vmatpush1.msra.mxu0 %v220
    %233 = vmatprep.subr.mxu0 0.0
    %234 = vmatpush1.msra.mxu0 %v221
    %235 = vmatprep.subr.mxu0 0.0
    %236 = vmatpush1.msra.mxu0 %v222
    %237 = vmatprep.subr.mxu0 0.0
    %238 = vmatpush1.msra.mxu0 %v223
    %239 = vmatprep.subr.mxu0 0.0
    %240 = vmatpush1.msra.mxu0 0.0
    %241 = vmatprep.subr.mxu0 0.0
    %242 = vmatpush1.msra.mxu0 0.0
    %243 = vmatprep.subr.mxu0 0.0
    %244 = vmatpush1.msra.mxu0 0.0
    %245 = vmatprep.subr.mxu0 0.0
    %246 = vmatpush1.msra.mxu0 0.0
    %247 = vmatprep.subr.mxu0 0.0
    %248 = vmatpush1.msra.mxu0 0.0
    %249 = vmatprep.subr.mxu0 0.0
    %250 = vmatpush1.msra.mxu0 0.0
    %251 = vmatprep.subr.mxu0 0.0
    %252 = vmatpush1.msra.mxu0 0.0
    %253 = vmatprep.subr.mxu0 0.0
    %254 = vmatpush1.msra.mxu0 0.0
    %255 = vmatprep.subr.mxu0 0.0
    %256 = vmatpush1.msra.mxu0 0.0
    %257 = vmatprep.subr.mxu0 0.0
    %258 = vmatpush1.msra.mxu0 0.0
    %259 = vmatprep.subr.mxu0 0.0
    %260 = vmatpush1.msra.mxu0 0.0
    %261 = vmatprep.subr.mxu0 0.0
    %262 = vmatpush1.msra.mxu0 0.0
    %263 = vmatprep.subr.mxu0 0.0
    %264 = vmatpush1.msra.mxu0 0.0
    %265 = vmatprep.subr.mxu0 0.0
    %266 = vmatpush1.msra.mxu0 0.0
    %267 = vmatprep.subr.mxu0 0.0
    %268 = vmatpush1.msra.mxu0 0.0
    %269 = vmatprep.subr.mxu0 0.0
    %270 = vmatpush1.msra.mxu0 0.0
    %271 = vmatprep.subr.mxu0 0.0
    %272 = vmatpush1.msra.mxu0 0.0
    %273 = vmatprep.subr.mxu0 0.0
    %274 = vmatpush1.msra.mxu0 0.0
    %275 = vmatprep.subr.mxu0 0.0
    %276 = vmatpush1.msra.mxu0 0.0
    %277 = vmatprep.subr.mxu0 0.0
    %278 = vmatpush1.msra.mxu0 0.0
    %279 = vmatprep.subr.mxu0 0.0
    %280 = vmatpush1.msra.mxu0 0.0
    %281 = vmatprep.subr.mxu0 0.0
    %282 = vmatpush1.msra.mxu0 0.0
    %283 = vmatprep.subr.mxu0 0.0
    %284 = vmatpush1.msra.mxu0 0.0
    %285 = vmatprep.subr.mxu0 0.0
    %286 = vmatpush1.msra.mxu0 0.0
    %287 = vmatprep.subr.mxu0 0.0
    %288 = vmatpush1.msra.mxu0 0.0
    %289 = vmatprep.subr.mxu0 0.0
    %290 = vmatpush1.msra.mxu0 0.0
    %291 = vmatprep.subr.mxu0 0.0
    %292 = vmatpush1.msra.mxu0 0.0
    %293 = vmatprep.subr.mxu0 0.0
    %294 = vmatpush1.msra.mxu0 0.0
    %295 = vmatprep.mubr.f32.mxu0 0.0
    %296 = vmatmul.mubr.f32.gmra.mrb[0].mxu0 %v120
    %v297 = vpop.f32.mrb[0].mxu0
    %v298 = vadd.f32 %v229, %v297
    %v299 = vpop.f32.mrb[0].mxu0
    %300 = vmatprep.mubr.f32.mxu0 0.0
    %301 = vmatmul.mubr.f32.gmra.mrb[0].mxu0 %v123
    %v302 = vpop.f32.mrb[0].mxu0
    %v303 = vadd.f32 %v229, %v302
    %v304 = vpop.f32.mrb[0].mxu0
    %305 = vmatprep.mubr.f32.mxu0 0.0
    %306 = vmatmul.mubr.f32.gmra.mrb[0].mxu0 %v126
    %v307 = vpop.f32.mrb[0].mxu0
    %v308 = vadd.f32 %v229, %v307
    %v309 = vpop.f32.mrb[0].mxu0
    %310 = vmatprep.mubr.f32.mxu0 0.0
    %311 = vmatmul.mubr.f32.gmra.mrb[0].mxu0 %v129
    %v312 = vpop.f32.mrb[0].mxu0
    %v313 = vadd.f32 %v229, %v312
    %v314 = vpop.f32.mrb[0].mxu0
    %315 = vdwg.mxu0
    %v316 = vld [vmem:[#allocation8] sm:$0xff]
    %v317 = vld [vmem:[#allocation8 + $0x8] sm:$0xff]
    %v318 = vld [vmem:[#allocation8 + $0x10] sm:$0xff]
    %v319 = vld [vmem:[#allocation8 + $0x18] sm:$0xff]
    %v320 = vld [vmem:[%s6] sm:$0x1]
    %v322 = vlaneseq
    %v323 = vshrl.u32 %v322, 7
    %v324 = vsub.s32 0, %v323
    %v325 = vrot.slane %v320, %v324
    %327 = vmatprep.subr.mxu0 0.0
    %328 = vmatpush1.msra.mxu0 %v316
    %329 = vmatprep.subr.mxu0 0.0
    %330 = vmatpush1.msra.mxu0 %v317
    %331 = vmatprep.subr.mxu0 0.0
    %332 = vmatpush1.msra.mxu0 %v318
    %333 = vmatprep.subr.mxu0 0.0
    %334 = vmatpush1.msra.mxu0 %v319
    %335 = vmatprep.subr.mxu0 0.0
    %336 = vmatpush1.msra.mxu0 0.0
    %337 = vmatprep.subr.mxu0 0.0
    %338 = vmatpush1.msra.mxu0 0.0
    %339 = vmatprep.subr.mxu0 0.0
    %340 = vmatpush1.msra.mxu0 0.0
    %341 = vmatprep.subr.mxu0 0.0
    %342 = vmatpush1.msra.mxu0 0.0
    %343 = vmatprep.subr.mxu0 0.0
    %344 = vmatpush1.msra.mxu0 0.0
    %345 = vmatprep.subr.mxu0 0.0
    %346 = vmatpush1.msra.mxu0 0.0
    %347 = vmatprep.subr.mxu0 0.0
    %348 = vmatpush1.msra.mxu0 0.0
    %349 = vmatprep.subr.mxu0 0.0
    %350 = vmatpush1.msra.mxu0 0.0
    %351 = vmatprep.subr.mxu0 0.0
    %352 = vmatpush1.msra.mxu0 0.0
    %353 = vmatprep.subr.mxu0 0.0
    %354 = vmatpush1.msra.mxu0 0.0
    %355 = vmatprep.subr.mxu0 0.0
    %356 = vmatpush1.msra.mxu0 0.0
    %357 = vmatprep.subr.mxu0 0.0
    %358 = vmatpush1.msra.mxu0 0.0
    %359 = vmatprep.subr.mxu0 0.0
    %360 = vmatpush1.msra.mxu0 0.0
    %361 = vmatprep.subr.mxu0 0.0
    %362 = vmatpush1.msra.mxu0 0.0
    %363 = vmatprep.subr.mxu0 0.0
    %364 = vmatpush1.msra.mxu0 0.0
    %365 = vmatprep.subr.mxu0 0.0
    %366 = vmatpush1.msra.mxu0 0.0
    %367 = vmatprep.subr.mxu0 0.0
    %368 = vmatpush1.msra.mxu0 0.0
    %369 = vmatprep.subr.mxu0 0.0
    %370 = vmatpush1.msra.mxu0 0.0
    %371 = vmatprep.subr.mxu0 0.0
    %372 = vmatpush1.msra.mxu0 0.0
    %373 = vmatprep.subr.mxu0 0.0
    %374 = vmatpush1.msra.mxu0 0.0
    %375 = vmatprep.subr.mxu0 0.0
    %376 = vmatpush1.msra.mxu0 0.0
    %377 = vmatprep.subr.mxu0 0.0
    %378 = vmatpush1.msra.mxu0 0.0
    %379 = vmatprep.subr.mxu0 0.0
    %380 = vmatpush1.msra.mxu0 0.0
    %381 = vmatprep.subr.mxu0 0.0
    %382 = vmatpush1.msra.mxu0 0.0
    %383 = vmatprep.subr.mxu0 0.0
    %384 = vmatpush1.msra.mxu0 0.0
    %385 = vmatprep.subr.mxu0 0.0
    %386 = vmatpush1.msra.mxu0 0.0
    %387 = vmatprep.subr.mxu0 0.0
    %388 = vmatpush1.msra.mxu0 0.0
    %389 = vmatprep.subr.mxu0 0.0
    %390 = vmatpush1.msra.mxu0 0.0
    %391 = vmatprep.mubr.f32.mxu0 0.0
    %392 = vmatmul.mubr.f32.gmra.mrb[0].mxu0 %v120
    %v393 = vpop.f32.mrb[0].mxu0
    %v394 = vadd.f32 %v325, %v393
    %v395 = vpop.f32.mrb[0].mxu0
    %396 = vmatprep.mubr.f32.mxu0 0.0
    %397 = vmatmul.mubr.f32.gmra.mrb[0].mxu0 %v123
    %v398 = vpop.f32.mrb[0].mxu0
    %v399 = vadd.f32 %v325, %v398
    %v400 = vpop.f32.mrb[0].mxu0
    %401 = vmatprep.mubr.f32.mxu0 0.0
    %402 = vmatmul.mubr.f32.gmra.mrb[0].mxu0 %v126
    %v403 = vpop.f32.mrb[0].mxu0
    %v404 = vadd.f32 %v325, %v403
    %v405 = vpop.f32.mrb[0].mxu0
    %406 = vmatprep.mubr.f32.mxu0 0.0
    %407 = vmatmul.mubr.f32.gmra.mrb[0].mxu0 %v129
    %v408 = vpop.f32.mrb[0].mxu0
    %v409 = vadd.f32 %v325, %v408
    %v410 = vpop.f32.mrb[0].mxu0
    %411 = vdwg.mxu0
    %v412 = vld [vmem:[#allocation10] sm:$0xff]
    %v413 = vld [vmem:[#allocation10 + $0x8] sm:$0xff]
    %v414 = vld [vmem:[#allocation10 + $0x10] sm:$0xff]
    %v415 = vld [vmem:[#allocation10 + $0x18] sm:$0xff]
    %v416 = vld [vmem:[%s8] sm:$0x1]
    %vm417 = vcmask 130048
    %v419 = vsel %vm417, %v216, 0
    %v422 = vsel %vm417, %v217, 0
    %v425 = vsel %vm417, %v298, 0
    %v428 = vsel %vm417, %v303, 0
    %430 = vmatprep.subr.mxu0 0.0
    %431 = vmatpush1.xpose.msra.mxu0 %v425
    %432 = vmatprep.subr.mxu0 0.0
    %433 = vmatpush1.xpose.msra.mxu0 %v428
    %434 = vmatprep.subr.mxu0 0.0
    %435 = vmatpush1.xpose.msra.mxu0 0.0
    %436 = vmatprep.subr.mxu0 0.0
    %437 = vmatpush1.xpose.msra.mxu0 0.0
    %438 = vmatprep.subr.mxu0 0.0
    %439 = vmatpush1.xpose.msra.mxu0 0.0
    %440 = vmatprep.subr.mxu0 0.0
    %441 = vmatpush1.xpose.msra.mxu0 0.0
    %442 = vmatprep.subr.mxu0 0.0
    %443 = vmatpush1.xpose.msra.mxu0 0.0
    %444 = vmatprep.subr.mxu0 0.0
    %445 = vmatpush1.xpose.msra.mxu0 0.0
    %446 = vmatprep.subr.mxu0 0.0
    %447 = vmatpush1.xpose.msra.mxu0 0.0
    %448 = vmatprep.subr.mxu0 0.0
    %449 = vmatpush1.xpose.msra.mxu0 0.0
    %450 = vmatprep.subr.mxu0 0.0
    %451 = vmatpush1.xpose.msra.mxu0 0.0
    %452 = vmatprep.subr.mxu0 0.0
    %453 = vmatpush1.xpose.msra.mxu0 0.0
    %454 = vmatprep.subr.mxu0 0.0
    %455 = vmatpush1.xpose.msra.mxu0 0.0
    %456 = vmatprep.subr.mxu0 0.0
    %457 = vmatpush1.xpose.msra.mxu0 0.0
    %458 = vmatprep.subr.mxu0 0.0
    %459 = vmatpush1.xpose.msra.mxu0 0.0
    %460 = vmatprep.subr.mxu0 0.0
    %461 = vmatpush1.xpose.msra.mxu0 0.0
    %462 = vmatprep.subr.mxu0 0.0
    %463 = vmatpush1.xpose.msra.mxu0 0.0
    %464 = vmatprep.subr.mxu0 0.0
    %465 = vmatpush1.xpose.msra.mxu0 0.0
    %466 = vmatprep.subr.mxu0 0.0
    %467 = vmatpush1.xpose.msra.mxu0 0.0
    %468 = vmatprep.subr.mxu0 0.0
    %469 = vmatpush1.xpose.msra.mxu0 0.0
    %470 = vmatprep.subr.mxu0 0.0
    %471 = vmatpush1.xpose.msra.mxu0 0.0
    %472 = vmatprep.subr.mxu0 0.0
    %473 = vmatpush1.xpose.msra.mxu0 0.0
    %474 = vmatprep.subr.mxu0 0.0
    %475 = vmatpush1.xpose.msra.mxu0 0.0
    %476 = vmatprep.subr.mxu0 0.0
    %477 = vmatpush1.xpose.msra.mxu0 0.0
    %478 = vmatprep.subr.mxu0 0.0
    %479 = vmatpush1.xpose.msra.mxu0 0.0
    %480 = vmatprep.subr.mxu0 0.0
    %481 = vmatpush1.xpose.msra.mxu0 0.0
    %482 = vmatprep.subr.mxu0 0.0
    %483 = vmatpush1.xpose.msra.mxu0 0.0
    %484 = vmatprep.subr.mxu0 0.0
    %485 = vmatpush1.xpose.msra.mxu0 0.0
    %486 = vmatprep.subr.mxu0 0.0
    %487 = vmatpush1.xpose.msra.mxu0 0.0
    %488 = vmatprep.subr.mxu0 0.0
    %489 = vmatpush1.xpose.msra.mxu0 0.0
    %490 = vmatprep.subr.mxu0 0.0
    %491 = vmatpush1.xpose.msra.mxu0 0.0
    %492 = vmatprep.subr.mxu0 0.0
    %493 = vmatpush1.xpose.msra.mxu0 0.0
    %494 = vmatprep.mubr.f32.mxu0 0.0
    %495 = vmatmul.mubr.f32.gmra.mrb[0].mxu0 %v419
    %v496 = vpop.f32.mrb[0].mxu0
    %v497 = vadd.f32 0.0, %v496
    %v498 = vpop.f32.mrb[0].mxu0
    %499 = vmatprep.mubr.f32.mxu0 0.0
    %500 = vmatmul.mubr.f32.gmra.mrb[0].mxu0 %v422
    %v501 = vpop.f32.mrb[0].mxu0
    %v502 = vadd.f32 0.0, %v501
    %v503 = vpop.f32.mrb[0].mxu0
    %504 = vdwg.mxu0
    %v505 = vsel %vm417, %v497, -inf
    %506 = vmax.xlane.f32.xlu0 %v505
    %v507 = vpop.xlane.xlu0 %506
    %v508 = vsel %vm417, %v502, -inf
    %509 = vmax.xlane.f32.xlu0 %v508
    %v510 = vpop.xlane.xlu0 %509
    %v511 = vsub.f32 %v497, %v507
    %v512 = vsub.f32 %v502, %v510
    %v513 = vmul.f32 %v511, 1.442695
    %v514 = vpow.pop %v513
    %v515 = vmul.f32 %v512, 1.442695
    %v516 = vpow.pop %v515
    %v517 = vsel %vm417, %v514, 0.0
    %518 = vadd.xlane.f32.xlu0 %v517
    %v519 = vpop.xlane.xlu0 %518
    %v520 = vsel %vm417, %v516, 0.0
    %521 = vadd.xlane.f32.xlu0 %v520
    %v522 = vpop.xlane.xlu0 %521
    %v523 = vrcp.pop %v519
    %v524 = vrcp.pop %v522
    %v525 = vmul.f32 %v514, %v523
    %v526 = vmul.f32 %v516, %v524
    %v528 = vsel %vm417, %v525, 0
    %v531 = vsel %vm417, %v526, 0
    %533 = vmatprep.subr.mxu0 0.0
    %534 = vmatpush1.msra.mxu0 %v394
    %535 = vmatprep.subr.mxu0 0.0
    %536 = vmatpush1.msra.mxu0 %v399
    %537 = vmatprep.subr.mxu0 0.0
    %538 = vmatpush1.msra.mxu0 0.0
    %539 = vmatprep.subr.mxu0 0.0
    %540 = vmatpush1.msra.mxu0 0.0
    %541 = vmatprep.subr.mxu0 0.0
    %542 = vmatpush1.msra.mxu0 0.0
    %543 = vmatprep.subr.mxu0 0.0
    %544 = vmatpush1.msra.mxu0 0.0
    %545 = vmatprep.subr.mxu0 0.0
    %546 = vmatpush1.msra.mxu0 0.0
    %547 = vmatprep.subr.mxu0 0.0
    %548 = vmatpush1.msra.mxu0 0.0
    %549 = vmatprep.subr.mxu0 0.0
    %550 = vmatpush1.msra.mxu0 0.0
    %551 = vmatprep.subr.mxu0 0.0
    %552 = vmatpush1.msra.mxu0 0.0
    %553 = vmatprep.subr.mxu0 0.0
    %554 = vmatpush1.msra.mxu0 0.0
    %555 = vmatprep.subr.mxu0 0.0
    %556 = vmatpush1.msra.mxu0 0.0
    %557 = vmatprep.subr.mxu0 0.0
    %558 = vmatpush1.msra.mxu0 0.0
    %559 = vmatprep.subr.mxu0 0.0
    %560 = vmatpush1.msra.mxu0 0.0
    %561 = vmatprep.subr.mxu0 0.0
    %562 = vmatpush1.msra.mxu0 0.0
    %563 = vmatprep.subr.mxu0 0.0
    %564 = vmatpush1.msra.mxu0 0.0
    %565 = vmatprep.subr.mxu0 0.0
    %566 = vmatpush1.msra.mxu0 0.0
    %567 = vmatprep.subr.mxu0 0.0
    %568 = vmatpush1.msra.mxu0 0.0
    %569 = vmatprep.subr.mxu0 0.0
    %570 = vmatpush1.msra.mxu0 0.0
    %571 = vmatprep.subr.mxu0 0.0
    %572 = vmatpush1.msra.mxu0 0.0
    %573 = vmatprep.subr.mxu0 0.0
    %574 = vmatpush1.msra.mxu0 0.0
    %575 = vmatprep.subr.mxu0 0.0
    %576 = vmatpush1.msra.mxu0 0.0
    %577 = vmatprep.subr.mxu0 0.0
    %578 = vmatpush1.msra.mxu0 0.0
    %579 = vmatprep.subr.mxu0 0.0
    %580 = vmatpush1.msra.mxu0 0.0
    %581 = vmatprep.subr.mxu0 0.0
    %582 = vmatpush1.msra.mxu0 0.0
    %583 = vmatprep.subr.mxu0 0.0
    %584 = vmatpush1.msra.mxu0 0.0
    %585 = vmatprep.subr.mxu0 0.0
    %586 = vmatpush1.msra.mxu0 0.0
    %587 = vmatprep.subr.mxu0 0.0
    %588 = vmatpush1.msra.mxu0 0.0
    %589 = vmatprep.subr.mxu0 0.0
    %590 = vmatpush1.msra.mxu0 0.0
    %591 = vmatprep.subr.mxu0 0.0
    %592 = vmatpush1.msra.mxu0 0.0
    %593 = vmatprep.subr.mxu0 0.0
    %594 = vmatpush1.msra.mxu0 0.0
    %595 = vmatprep.subr.mxu0 0.0
    %596 = vmatpush1.msra.mxu0 0.0
    %597 = vmatprep.mubr.f32.mxu0 0.0
    %598 = vmatmul.mubr.f32.gmra.mrb[0].mxu0 %v528
    %v599 = vpop.f32.mrb[0].mxu0
    %v600 = vadd.f32 0.0, %v599
    %v601 = vpop.f32.mrb[0].mxu0
    %602 = vmatprep.mubr.f32.mxu0 0.0
    %603 = vmatmul.mubr.f32.gmra.mrb[0].mxu0 %v531
    %v604 = vpop.f32.mrb[0].mxu0
    %v605 = vadd.f32 0.0, %v604
    %v606 = vpop.f32.mrb[0].mxu0
    %607 = vdwg.mxu0
    %608 = vrot.lane.b32.xlu0 %v216, 112
    %v609 = vpop.permute.xlu0 %608
    %610 = vrot.lane.b32.xlu0 %v217, 112
    %v611 = vpop.permute.xlu0 %610
    %612 = vrot.lane.b32.xlu0 %v298, 112
    %v613 = vpop.permute.xlu0 %612
    %614 = vrot.lane.b32.xlu0 %v303, 112
    %v615 = vpop.permute.xlu0 %614
    %v616 = vsel %vm417, %v609, 0
    %v618 = vsel %vm417, %v611, 0
    %v620 = vsel %vm417, %v613, 0
    %v622 = vsel %vm417, %v615, 0
    %624 = vmatprep.subr.mxu0 0.0
    %625 = vmatpush1.xpose.msra.mxu0 %v620
    %626 = vmatprep.subr.mxu0 0.0
    %627 = vmatpush1.xpose.msra.mxu0 %v622
    %628 = vmatprep.subr.mxu0 0.0
    %629 = vmatpush1.xpose.msra.mxu0 0.0
    %630 = vmatprep.subr.mxu0 0.0
    %631 = vmatpush1.xpose.msra.mxu0 0.0
    %632 = vmatprep.subr.mxu0 0.0
    %633 = vmatpush1.xpose.msra.mxu0 0.0
    %634 = vmatprep.subr.mxu0 0.0
    %635 = vmatpush1.xpose.msra.mxu0 0.0
    %636 = vmatprep.subr.mxu0 0.0
    %637 = vmatpush1.xpose.msra.mxu0 0.0
    %638 = vmatprep.subr.mxu0 0.0
    %639 = vmatpush1.xpose.msra.mxu0 0.0
    %640 = vmatprep.subr.mxu0 0.0
    %641 = vmatpush1.xpose.msra.mxu0 0.0
    %642 = vmatprep.subr.mxu0 0.0
    %643 = vmatpush1.xpose.msra.mxu0 0.0
    %644 = vmatprep.subr.mxu0 0.0
    %645 = vmatpush1.xpose.msra.mxu0 0.0
    %646 = vmatprep.subr.mxu0 0.0
    %647 = vmatpush1.xpose.msra.mxu0 0.0
    %648 = vmatprep.subr.mxu0 0.0
    %649 = vmatpush1.xpose.msra.mxu0 0.0
    %650 = vmatprep.subr.mxu0 0.0
    %651 = vmatpush1.xpose.msra.mxu0 0.0
    %652 = vmatprep.subr.mxu0 0.0
    %653 = vmatpush1.xpose.msra.mxu0 0.0
    %654 = vmatprep.subr.mxu0 0.0
    %655 = vmatpush1.xpose.msra.mxu0 0.0
    %656 = vmatprep.subr.mxu0 0.0
    %657 = vmatpush1.xpose.msra.mxu0 0.0
    %658 = vmatprep.subr.mxu0 0.0
    %659 = vmatpush1.xpose.msra.mxu0 0.0
    %660 = vmatprep.subr.mxu0 0.0
    %661 = vmatpush1.xpose.msra.mxu0 0.0
    %662 = vmatprep.subr.mxu0 0.0
    %663 = vmatpush1.xpose.msra.mxu0 0.0
    %664 = vmatprep.subr.mxu0 0.0
    %665 = vmatpush1.xpose.msra.mxu0 0.0
    %666 = vmatprep.subr.mxu0 0.0
    %667 = vmatpush1.xpose.msra.mxu0 0.0
    %668 = vmatprep.subr.mxu0 0.0
    %669 = vmatpush1.xpose.msra.mxu0 0.0
    %670 = vmatprep.subr.mxu0 0.0
    %671 = vmatpush1.xpose.msra.mxu0 0.0
    %672 = vmatprep.subr.mxu0 0.0
    %673 = vmatpush1.xpose.msra.mxu0 0.0
    %674 = vmatprep.subr.mxu0 0.0
    %675 = vmatpush1.xpose.msra.mxu0 0.0
    %676 = vmatprep.subr.mxu0 0.0
    %677 = vmatpush1.xpose.msra.mxu0 0.0
    %678 = vmatprep.subr.mxu0 0.0
    %679 = vmatpush1.xpose.msra.mxu0 0.0
    %680 = vmatprep.subr.mxu0 0.0
    %681 = vmatpush1.xpose.msra.mxu0 0.0
    %682 = vmatprep.subr.mxu0 0.0
    %683 = vmatpush1.xpose.msra.mxu0 0.0
    %684 = vmatprep.subr.mxu0 0.0
    %685 = vmatpush1.xpose.msra.mxu0 0.0
    %686 = vmatprep.subr.mxu0 0.0
    %687 = vmatpush1.xpose.msra.mxu0 0.0
    %688 = vmatprep.mubr.f32.mxu0 0.0
    %689 = vmatmul.mubr.f32.gmra.mrb[0].mxu0 %v616
    %v690 = vpop.f32.mrb[0].mxu0
    %v691 = vadd.f32 0.0, %v690
    %v692 = vpop.f32.mrb[0].mxu0
    %693 = vmatprep.mubr.f32.mxu0 0.0
    %694 = vmatmul.mubr.f32.gmra.mrb[0].mxu0 %v618
    %v695 = vpop.f32.mrb[0].mxu0
    %v696 = vadd.f32 0.0, %v695
    %v697 = vpop.f32.mrb[0].mxu0
    %698 = vdwg.mxu0
    %v699 = vsel %vm417, %v691, -inf
    %700 = vmax.xlane.f32.xlu0 %v699
    %v701 = vpop.xlane.xlu0 %700
    %v702 = vsel %vm417, %v696, -inf
    %703 = vmax.xlane.f32.xlu0 %v702
    %v704 = vpop.xlane.xlu0 %703
    %v705 = vsub.f32 %v691, %v701
    %v706 = vsub.f32 %v696, %v704
    %v707 = vmul.f32 %v705, 1.442695
    %v708 = vpow.pop %v707
    %v709 = vmul.f32 %v706, 1.442695
    %v710 = vpow.pop %v709
    %v711 = vsel %vm417, %v708, 0.0
    %712 = vadd.xlane.f32.xlu0 %v711
    %v713 = vpop.xlane.xlu0 %712
    %v714 = vsel %vm417, %v710, 0.0
    %715 = vadd.xlane.f32.xlu0 %v714
    %v716 = vpop.xlane.xlu0 %715
    %v717 = vrcp.pop %v713
    %v718 = vrcp.pop %v716
    %v719 = vmul.f32 %v708, %v717
    %v720 = vmul.f32 %v710, %v718
    %723 = vrot.lane.b32.xlu0 %v394, 112
    %v724 = vpop.permute.xlu0 %723
    %725 = vrot.lane.b32.xlu0 %v399, 112
    %v726 = vpop.permute.xlu0 %725
    %v730 = vsel %vm417, %v719, 0
    %v733 = vsel %vm417, %v720, 0
    %735 = vmatprep.subr.mxu0 0.0
    %736 = vmatpush1.msra.mxu0 %v724
    %737 = vmatprep.subr.mxu0 0.0
    %738 = vmatpush1.msra.mxu0 %v726
    %739 = vmatprep.subr.mxu0 0.0
    %740 = vmatpush1.msra.mxu0 0.0
    %741 = vmatprep.subr.mxu0 0.0
    %742 = vmatpush1.msra.mxu0 0.0
    %743 = vmatprep.subr.mxu0 0.0
    %744 = vmatpush1.msra.mxu0 0.0
    %745 = vmatprep.subr.mxu0 0.0
    %746 = vmatpush1.msra.mxu0 0.0
    %747 = vmatprep.subr.mxu0 0.0
    %748 = vmatpush1.msra.mxu0 0.0
    %749 = vmatprep.subr.mxu0 0.0
    %750 = vmatpush1.msra.mxu0 0.0
    %751 = vmatprep.subr.mxu0 0.0
    %752 = vmatpush1.msra.mxu0 0.0
    %753 = vmatprep.subr.mxu0 0.0
    %754 = vmatpush1.msra.mxu0 0.0
    %755 = vmatprep.subr.mxu0 0.0
    %756 = vmatpush1.msra.mxu0 0.0
    %757 = vmatprep.subr.mxu0 0.0
    %758 = vmatpush1.msra.mxu0 0.0
    %759 = vmatprep.subr.mxu0 0.0
    %760 = vmatpush1.msra.mxu0 0.0
    %761 = vmatprep.subr.mxu0 0.0
    %762 = vmatpush1.msra.mxu0 0.0
    %763 = vmatprep.subr.mxu0 0.0
    %764 = vmatpush1.msra.mxu0 0.0
    %765 = vmatprep.subr.mxu0 0.0
    %766 = vmatpush1.msra.mxu0 0.0
    %767 = vmatprep.subr.mxu0 0.0
    %768 = vmatpush1.msra.mxu0 0.0
    %769 = vmatprep.subr.mxu0 0.0
    %770 = vmatpush1.msra.mxu0 0.0
    %771 = vmatprep.subr.mxu0 0.0
    %772 = vmatpush1.msra.mxu0 0.0
    %773 = vmatprep.subr.mxu0 0.0
    %774 = vmatpush1.msra.mxu0 0.0
    %775 = vmatprep.subr.mxu0 0.0
    %776 = vmatpush1.msra.mxu0 0.0
    %777 = vmatprep.subr.mxu0 0.0
    %778 = vmatpush1.msra.mxu0 0.0
    %779 = vmatprep.subr.mxu0 0.0
    %780 = vmatpush1.msra.mxu0 0.0
    %781 = vmatprep.subr.mxu0 0.0
    %782 = vmatpush1.msra.mxu0 0.0
    %783 = vmatprep.subr.mxu0 0.0
    %784 = vmatpush1.msra.mxu0 0.0
    %785 = vmatprep.subr.mxu0 0.0
    %786 = vmatpush1.msra.mxu0 0.0
    %787 = vmatprep.subr.mxu0 0.0
    %788 = vmatpush1.msra.mxu0 0.0
    %789 = vmatprep.subr.mxu0 0.0
    %790 = vmatpush1.msra.mxu0 0.0
    %791 = vmatprep.subr.mxu0 0.0
    %792 = vmatpush1.msra.mxu0 0.0
    %793 = vmatprep.subr.mxu0 0.0
    %794 = vmatpush1.msra.mxu0 0.0
    %795 = vmatprep.subr.mxu0 0.0
    %796 = vmatpush1.msra.mxu0 0.0
    %797 = vmatprep.subr.mxu0 0.0
    %798 = vmatpush1.msra.mxu0 0.0
    %799 = vmatprep.mubr.f32.mxu0 0.0
    %800 = vmatmul.mubr.f32.gmra.mrb[0].mxu0 %v730
    %v801 = vpop.f32.mrb[0].mxu0
    %v802 = vadd.f32 0.0, %v801
    %v803 = vpop.f32.mrb[0].mxu0
    %804 = vmatprep.mubr.f32.mxu0 0.0
    %805 = vmatmul.mubr.f32.gmra.mrb[0].mxu0 %v733
    %v806 = vpop.f32.mrb[0].mxu0
    %v807 = vadd.f32 0.0, %v806
    %v808 = vpop.f32.mrb[0].mxu0
    %809 = vdwg.mxu0
    %v811 = vsel %vm417, %v802, 0
    %v814 = vsel %vm417, %v807, 0
    %816 = vmatprep.subr.mxu0 0.0
    %817 = vmatpush1.msra.mxu0 %v414
    %818 = vmatprep.subr.mxu0 0.0
    %819 = vmatpush1.msra.mxu0 %v415
    %820 = vmatprep.subr.mxu0 0.0
    %821 = vmatpush1.msra.mxu0 0.0
    %822 = vmatprep.subr.mxu0 0.0
    %823 = vmatpush1.msra.mxu0 0.0
    %824 = vmatprep.subr.mxu0 0.0
    %825 = vmatpush1.msra.mxu0 0.0
    %826 = vmatprep.subr.mxu0 0.0
    %827 = vmatpush1.msra.mxu0 0.0
    %828 = vmatprep.subr.mxu0 0.0
    %829 = vmatpush1.msra.mxu0 0.0
    %830 = vmatprep.subr.mxu0 0.0
    %831 = vmatpush1.msra.mxu0 0.0
    %832 = vmatprep.subr.mxu0 0.0
    %833 = vmatpush1.msra.mxu0 0.0
    %834 = vmatprep.subr.mxu0 0.0
    %835 = vmatpush1.msra.mxu0 0.0
    %836 = vmatprep.subr.mxu0 0.0
    %837 = vmatpush1.msra.mxu0 0.0
    %838 = vmatprep.subr.mxu0 0.0
    %839 = vmatpush1.msra.mxu0 0.0
    %840 = vmatprep.subr.mxu0 0.0
    %841 = vmatpush1.msra.mxu0 0.0
    %842 = vmatprep.subr.mxu0 0.0
    %843 = vmatpush1.msra.mxu0 0.0
    %844 = vmatprep.subr.mxu0 0.0
    %845 = vmatpush1.msra.mxu0 0.0
    %846 = vmatprep.subr.mxu0 0.0
    %847 = vmatpush1.msra.mxu0 0.0
    %848 = vmatprep.subr.mxu0 0.0
    %849 = vmatpush1.msra.mxu0 0.0
    %850 = vmatprep.subr.mxu0 0.0
    %851 = vmatpush1.msra.mxu0 0.0
    %852 = vmatprep.subr.mxu0 0.0
    %853 = vmatpush1.msra.mxu0 0.0
    %854 = vmatprep.subr.mxu0 0.0
    %855 = vmatpush1.msra.mxu0 0.0
    %856 = vmatprep.subr.mxu0 0.0
    %857 = vmatpush1.msra.mxu0 0.0
    %858 = vmatprep.subr.mxu0 0.0
    %859 = vmatpush1.msra.mxu0 0.0
    %860 = vmatprep.subr.mxu0 0.0
    %861 = vmatpush1.msra.mxu0 0.0
    %862 = vmatprep.subr.mxu0 0.0
    %863 = vmatpush1.msra.mxu0 0.0
    %864 = vmatprep.subr.mxu0 0.0
    %865 = vmatpush1.msra.mxu0 0.0
    %866 = vmatprep.subr.mxu0 0.0
    %867 = vmatpush1.msra.mxu0 0.0
    %868 = vmatprep.subr.mxu0 0.0
    %869 = vmatpush1.msra.mxu0 0.0
    %870 = vmatprep.subr.mxu0 0.0
    %871 = vmatpush1.msra.mxu0 0.0
    %872 = vmatprep.subr.mxu0 0.0
    %873 = vmatpush1.msra.mxu0 0.0
    %874 = vmatprep.subr.mxu0 0.0
    %875 = vmatpush1.msra.mxu0 0.0
    %876 = vmatprep.subr.mxu0 0.0
    %877 = vmatpush1.msra.mxu0 0.0
    %878 = vmatprep.subr.mxu0 0.0
    %879 = vmatpush1.msra.mxu0 0.0
    %880 = vmatprep.mubr.f32.mxu0 0.0
    %881 = vmatmul.mubr.f32.gmra.mrb[0].mxu0 %v811
    %v882 = vpop.f32.mrb[0].mxu0
    %v883 = vadd.f32 0.0, %v882
    %v884 = vpop.f32.mrb[0].mxu0
    %885 = vmatprep.mubr.f32.mxu0 0.0
    %886 = vmatmul.mubr.f32.gmra.mrb[0].mxu0 %v814
    %v887 = vpop.f32.mrb[0].mxu0
    %v888 = vadd.f32 0.0, %v887
    %v889 = vpop.f32.mrb[0].mxu0
    %890 = vdwg.mxu0
    %v892 = vsel %vm417, %v600, 0
    %v895 = vsel %vm417, %v605, 0
    %897 = vmatprep.subr.mxu0 0.0
    %898 = vmatpush1.msra.mxu0 %v412
    %899 = vmatprep.subr.mxu0 0.0
    %900 = vmatpush1.msra.mxu0 %v413
    %901 = vmatprep.subr.mxu0 0.0
    %902 = vmatpush1.msra.mxu0 0.0
    %903 = vmatprep.subr.mxu0 0.0
    %904 = vmatpush1.msra.mxu0 0.0
    %905 = vmatprep.subr.mxu0 0.0
    %906 = vmatpush1.msra.mxu0 0.0
    %907 = vmatprep.subr.mxu0 0.0
    %908 = vmatpush1.msra.mxu0 0.0
    %909 = vmatprep.subr.mxu0 0.0
    %910 = vmatpush1.msra.mxu0 0.0
    %911 = vmatprep.subr.mxu0 0.0
    %912 = vmatpush1.msra.mxu0 0.0
    %913 = vmatprep.subr.mxu0 0.0
    %914 = vmatpush1.msra.mxu0 0.0
    %915 = vmatprep.subr.mxu0 0.0
    %916 = vmatpush1.msra.mxu0 0.0
    %917 = vmatprep.subr.mxu0 0.0
    %918 = vmatpush1.msra.mxu0 0.0
    %919 = vmatprep.subr.mxu0 0.0
    %920 = vmatpush1.msra.mxu0 0.0
    %921 = vmatprep.subr.mxu0 0.0
    %922 = vmatpush1.msra.mxu0 0.0
    %923 = vmatprep.subr.mxu0 0.0
    %924 = vmatpush1.msra.mxu0 0.0
    %925 = vmatprep.subr.mxu0 0.0
    %926 = vmatpush1.msra.mxu0 0.0
    %927 = vmatprep.subr.mxu0 0.0
    %928 = vmatpush1.msra.mxu0 0.0
    %929 = vmatprep.subr.mxu0 0.0
    %930 = vmatpush1.msra.mxu0 0.0
    %931 = vmatprep.subr.mxu0 0.0
    %932 = vmatpush1.msra.mxu0 0.0
    %933 = vmatprep.subr.mxu0 0.0
    %934 = vmatpush1.msra.mxu0 0.0
    %935 = vmatprep.subr.mxu0 0.0
    %936 = vmatpush1.msra.mxu0 0.0
    %937 = vmatprep.subr.mxu0 0.0
    %938 = vmatpush1.msra.mxu0 0.0
    %939 = vmatprep.subr.mxu0 0.0
    %940 = vmatpush1.msra.mxu0 0.0
    %941 = vmatprep.subr.mxu0 0.0
    %942 = vmatpush1.msra.mxu0 0.0
    %943 = vmatprep.subr.mxu0 0.0
    %944 = vmatpush1.msra.mxu0 0.0
    %945 = vmatprep.subr.mxu0 0.0
    %946 = vmatpush1.msra.mxu0 0.0
    %947 = vmatprep.subr.mxu0 0.0
    %948 = vmatpush1.msra.mxu0 0.0
    %949 = vmatprep.subr.mxu0 0.0
    %950 = vmatpush1.msra.mxu0 0.0
    %951 = vmatprep.subr.mxu0 0.0
    %952 = vmatpush1.msra.mxu0 0.0
    %953 = vmatprep.subr.mxu0 0.0
    %954 = vmatpush1.msra.mxu0 0.0
    %955 = vmatprep.subr.mxu0 0.0
    %956 = vmatpush1.msra.mxu0 0.0
    %957 = vmatprep.subr.mxu0 0.0
    %958 = vmatpush1.msra.mxu0 0.0
    %959 = vmatprep.subr.mxu0 0.0
    %960 = vmatpush1.msra.mxu0 0.0
    %961 = vmatprep.mubr.f32.mxu0 0.0
    %962 = vmatmul.mubr.f32.gmra.mrb[0].mxu0 %v892
    %v963 = vpop.f32.mrb[0].mxu0
    %v964 = vadd.f32 %v883, %v963
    %v965 = vpop.f32.mrb[0].mxu0
    %966 = vmatprep.mubr.f32.mxu0 0.0
    %967 = vmatmul.mubr.f32.gmra.mrb[0].mxu0 %v895
    %v968 = vpop.f32.mrb[0].mxu0
    %v969 = vadd.f32 %v888, %v968
    %v970 = vpop.f32.mrb[0].mxu0
    %971 = vdwg.mxu0
    %972 = vrot.lane.b32.xlu0 %v719, 16
    %v973 = vpop.permute.xlu0 %972
    %974 = vrot.lane.b32.xlu0 %v720, 16
    %v975 = vpop.permute.xlu0 %974
    %v978 = vsel %vm417, %v525, %v973
    %v979 = vsel %vm417, %v526, %v975
    %980 = vst.msk [vmem:[%s10] sm:$0xff] %vm118, %v978
    %981 = vst.msk [vmem:[%s10 + $0x8] sm:$0xff] %vm118, %v979
    %v983 = vlaneseq
    %v984 = vshrl.u32 %v983, 7
    %v985 = vsub.s32 0, %v984
    %v986 = vrot.slane %v416, %v985
    %v988 = vadd.f32 %v964, %v986
    %v989 = vadd.f32 %v969, %v986
    %v990 = vadd.f32 %v988, %v103
    %v991 = vadd.f32 %v989, %v104
    %992 = vst.msk [vmem:[#allocation11] sm:$0xff] %vm118, %v990
    %993 = vst.msk [vmem:[#allocation11 + $0x8] sm:$0xff] %vm118, %v991
    %v995 = vsel %vm417, %v218, 0
    %v998 = vsel %vm417, %v219, 0
    %v1001 = vsel %vm417, %v308, 0
    %v1004 = vsel %vm417, %v313, 0
    %1006 = vmatprep.subr.mxu0 0.0
    %1007 = vmatpush1.xpose.msra.mxu0 %v1001
    %1008 = vmatprep.subr.mxu0 0.0
    %1009 = vmatpush1.xpose.msra.mxu0 %v1004
    %1010 = vmatprep.subr.mxu0 0.0
    %1011 = vmatpush1.xpose.msra.mxu0 0.0
    %1012 = vmatprep.subr.mxu0 0.0
    %1013 = vmatpush1.xpose.msra.mxu0 0.0
    %1014 = vmatprep.subr.mxu0 0.0
    %1015 = vmatpush1.xpose.msra.mxu0 0.0
    %1016 = vmatprep.subr.mxu0 0.0
    %1017 = vmatpush1.xpose.msra.mxu0 0.0
    %1018 = vmatprep.subr.mxu0 0.0
    %1019 = vmatpush1.xpose.msra.mxu0 0.0
    %1020 = vmatprep.subr.mxu0 0.0
    %1021 = vmatpush1.xpose.msra.mxu0 0.0
    %1022 = vmatprep.subr.mxu0 0.0
    %1023 = vmatpush1.xpose.msra.mxu0 0.0
    %1024 = vmatprep.subr.mxu0 0.0
    %1025 = vmatpush1.xpose.msra.mxu0 0.0
    %1026 = vmatprep.subr.mxu0 0.0
    %1027 = vmatpush1.xpose.msra.mxu0 0.0
    %1028 = vmatprep.subr.mxu0 0.0
    %1029 = vmatpush1.xpose.msra.mxu0 0.0
    %1030 = vmatprep.subr.mxu0 0.0
    %1031 = vmatpush1.xpose.msra.mxu0 0.0
    %1032 = vmatprep.subr.mxu0 0.0
    %1033 = vmatpush1.xpose.msra.mxu0 0.0
    %1034 = vmatprep.subr.mxu0 0.0
    %1035 = vmatpush1.xpose.msra.mxu0 0.0
    %1036 = vmatprep.subr.mxu0 0.0
    %1037 = vmatpush1.xpose.msra.mxu0 0.0
    %1038 = vmatprep.subr.mxu0 0.0
    %1039 = vmatpush1.xpose.msra.mxu0 0.0
    %1040 = vmatprep.subr.mxu0 0.0
    %1041 = vmatpush1.xpose.msra.mxu0 0.0
    %1042 = vmatprep.subr.mxu0 0.0
    %1043 = vmatpush1.xpose.msra.mxu0 0.0
    %1044 = vmatprep.subr.mxu0 0.0
    %1045 = vmatpush1.xpose.msra.mxu0 0.0
    %1046 = vmatprep.subr.mxu0 0.0
    %1047 = vmatpush1.xpose.msra.mxu0 0.0
    %1048 = vmatprep.subr.mxu0 0.0
    %1049 = vmatpush1.xpose.msra.mxu0 0.0
    %1050 = vmatprep.subr.mxu0 0.0
    %1051 = vmatpush1.xpose.msra.mxu0 0.0
    %1052 = vmatprep.subr.mxu0 0.0
    %1053 = vmatpush1.xpose.msra.mxu0 0.0
    %1054 = vmatprep.subr.mxu0 0.0
    %1055 = vmatpush1.xpose.msra.mxu0 0.0
    %1056 = vmatprep.subr.mxu0 0.0
    %1057 = vmatpush1.xpose.msra.mxu0 0.0
    %1058 = vmatprep.subr.mxu0 0.0
    %1059 = vmatpush1.xpose.msra.mxu0 0.0
    %1060 = vmatprep.subr.mxu0 0.0
    %1061 = vmatpush1.xpose.msra.mxu0 0.0
    %1062 = vmatprep.subr.mxu0 0.0
    %1063 = vmatpush1.xpose.msra.mxu0 0.0
    %1064 = vmatprep.subr.mxu0 0.0
    %1065 = vmatpush1.xpose.msra.mxu0 0.0
    %1066 = vmatprep.subr.mxu0 0.0
    %1067 = vmatpush1.xpose.msra.mxu0 0.0
    %1068 = vmatprep.subr.mxu0 0.0
    %1069 = vmatpush1.xpose.msra.mxu0 0.0
    %1070 = vmatprep.mubr.f32.mxu0 0.0
    %1071 = vmatmul.mubr.f32.gmra.mrb[0].mxu0 %v995
    %v1072 = vpop.f32.mrb[0].mxu0
    %v1073 = vadd.f32 0.0, %v1072
    %v1074 = vpop.f32.mrb[0].mxu0
    %1075 = vmatprep.mubr.f32.mxu0 0.0
    %1076 = vmatmul.mubr.f32.gmra.mrb[0].mxu0 %v998
    %v1077 = vpop.f32.mrb[0].mxu0
    %v1078 = vadd.f32 0.0, %v1077
    %v1079 = vpop.f32.mrb[0].mxu0
    %1080 = vdwg.mxu0
    %v1081 = vsel %vm417, %v1073, -inf
    %1082 = vmax.xlane.f32.xlu0 %v1081
    %v1083 = vpop.xlane.xlu0 %1082
    %v1084 = vsel %vm417, %v1078, -inf
    %1085 = vmax.xlane.f32.xlu0 %v1084
    %v1086 = vpop.xlane.xlu0 %1085
    %v1087 = vsub.f32 %v1073, %v1083
    %v1088 = vsub.f32 %v1078, %v1086
    %v1089 = vmul.f32 %v1087, 1.442695
    %v1090 = vpow.pop %v1089
    %v1091 = vmul.f32 %v1088, 1.442695
    %v1092 = vpow.pop %v1091
    %v1093 = vsel %vm417, %v1090, 0.0
    %1094 = vadd.xlane.f32.xlu0 %v1093
    %v1095 = vpop.xlane.xlu0 %1094
    %v1096 = vsel %vm417, %v1092, 0.0
    %1097 = vadd.xlane.f32.xlu0 %v1096
    %v1098 = vpop.xlane.xlu0 %1097
    %v1099 = vrcp.pop %v1095
    %v1100 = vrcp.pop %v1098
    %v1101 = vmul.f32 %v1090, %v1099
    %v1102 = vmul.f32 %v1092, %v1100
    %v1104 = vsel %vm417, %v1101, 0
    %v1107 = vsel %vm417, %v1102, 0
    %1109 = vmatprep.subr.mxu0 0.0
    %1110 = vmatpush1.msra.mxu0 %v404
    %1111 = vmatprep.subr.mxu0 0.0
    %1112 = vmatpush1.msra.mxu0 %v409
    %1113 = vmatprep.subr.mxu0 0.0
    %1114 = vmatpush1.msra.mxu0 0.0
    %1115 = vmatprep.subr.mxu0 0.0
    %1116 = vmatpush1.msra.mxu0 0.0
    %1117 = vmatprep.subr.mxu0 0.0
    %1118 = vmatpush1.msra.mxu0 0.0
    %1119 = vmatprep.subr.mxu0 0.0
    %1120 = vmatpush1.msra.mxu0 0.0
    %1121 = vmatprep.subr.mxu0 0.0
    %1122 = vmatpush1.msra.mxu0 0.0
    %1123 = vmatprep.subr.mxu0 0.0
    %1124 = vmatpush1.msra.mxu0 0.0
    %1125 = vmatprep.subr.mxu0 0.0
    %1126 = vmatpush1.msra.mxu0 0.0
    %1127 = vmatprep.subr.mxu0 0.0
    %1128 = vmatpush1.msra.mxu0 0.0
    %1129 = vmatprep.subr.mxu0 0.0
    %1130 = vmatpush1.msra.mxu0 0.0
    %1131 = vmatprep.subr.mxu0 0.0
    %1132 = vmatpush1.msra.mxu0 0.0
    %1133 = vmatprep.subr.mxu0 0.0
    %1134 = vmatpush1.msra.mxu0 0.0
    %1135 = vmatprep.subr.mxu0 0.0
    %1136 = vmatpush1.msra.mxu0 0.0
    %1137 = vmatprep.subr.mxu0 0.0
    %1138 = vmatpush1.msra.mxu0 0.0
    %1139 = vmatprep.subr.mxu0 0.0
    %1140 = vmatpush1.msra.mxu0 0.0
    %1141 = vmatprep.subr.mxu0 0.0
    %1142 = vmatpush1.msra.mxu0 0.0
    %1143 = vmatprep.subr.mxu0 0.0
    %1144 = vmatpush1.msra.mxu0 0.0
    %1145 = vmatprep.subr.mxu0 0.0
    %1146 = vmatpush1.msra.mxu0 0.0
    %1147 = vmatprep.subr.mxu0 0.0
    %1148 = vmatpush1.msra.mxu0 0.0
    %1149 = vmatprep.subr.mxu0 0.0
    %1150 = vmatpush1.msra.mxu0 0.0
    %1151 = vmatprep.subr.mxu0 0.0
    %1152 = vmatpush1.msra.mxu0 0.0
    %1153 = vmatprep.subr.mxu0 0.0
    %1154 = vmatpush1.msra.mxu0 0.0
    %1155 = vmatprep.subr.mxu0 0.0
    %1156 = vmatpush1.msra.mxu0 0.0
    %1157 = vmatprep.subr.mxu0 0.0
    %1158 = vmatpush1.msra.mxu0 0.0
    %1159 = vmatprep.subr.mxu0 0.0
    %1160 = vmatpush1.msra.mxu0 0.0
    %1161 = vmatprep.subr.mxu0 0.0
    %1162 = vmatpush1.msra.mxu0 0.0
    %1163 = vmatprep.subr.mxu0 0.0
    %1164 = vmatpush1.msra.mxu0 0.0
    %1165 = vmatprep.subr.mxu0 0.0
    %1166 = vmatpush1.msra.mxu0 0.0
    %1167 = vmatprep.subr.mxu0 0.0
    %1168 = vmatpush1.msra.mxu0 0.0
    %1169 = vmatprep.subr.mxu0 0.0
    %1170 = vmatpush1.msra.mxu0 0.0
    %1171 = vmatprep.subr.mxu0 0.0
    %1172 = vmatpush1.msra.mxu0 0.0
    %1173 = vmatprep.mubr.f32.mxu0 0.0
    %1174 = vmatmul.mubr.f32.gmra.mrb[0].mxu0 %v1104
    %v1175 = vpop.f32.mrb[0].mxu0
    %v1176 = vadd.f32 0.0, %v1175
    %v1177 = vpop.f32.mrb[0].mxu0
    %1178 = vmatprep.mubr.f32.mxu0 0.0
    %1179 = vmatmul.mubr.f32.gmra.mrb[0].mxu0 %v1107
    %v1180 = vpop.f32.mrb[0].mxu0
    %v1181 = vadd.f32 0.0, %v1180
    %v1182 = vpop.f32.mrb[0].mxu0
    %1183 = vdwg.mxu0
    %1184 = vrot.lane.b32.xlu0 %v218, 112
    %v1185 = vpop.permute.xlu0 %1184
    %1186 = vrot.lane.b32.xlu0 %v219, 112
    %v1187 = vpop.permute.xlu0 %1186
    %1188 = vrot.lane.b32.xlu0 %v308, 112
    %v1189 = vpop.permute.xlu0 %1188
    %1190 = vrot.lane.b32.xlu0 %v313, 112
    %v1191 = vpop.permute.xlu0 %1190
    %v1192 = vsel %vm417, %v1185, 0
    %v1194 = vsel %vm417, %v1187, 0
    %v1196 = vsel %vm417, %v1189, 0
    %v1198 = vsel %vm417, %v1191, 0
    %1200 = vmatprep.subr.mxu0 0.0
    %1201 = vmatpush1.xpose.msra.mxu0 %v1196
    %1202 = vmatprep.subr.mxu0 0.0
    %1203 = vmatpush1.xpose.msra.mxu0 %v1198
    %1204 = vmatprep.subr.mxu0 0.0
    %1205 = vmatpush1.xpose.msra.mxu0 0.0
    %1206 = vmatprep.subr.mxu0 0.0
    %1207 = vmatpush1.xpose.msra.mxu0 0.0
    %1208 = vmatprep.subr.mxu0 0.0
    %1209 = vmatpush1.xpose.msra.mxu0 0.0
    %1210 = vmatprep.subr.mxu0 0.0
    %1211 = vmatpush1.xpose.msra.mxu0 0.0
    %1212 = vmatprep.subr.mxu0 0.0
    %1213 = vmatpush1.xpose.msra.mxu0 0.0
    %1214 = vmatprep.subr.mxu0 0.0
    %1215 = vmatpush1.xpose.msra.mxu0 0.0
    %1216 = vmatprep.subr.mxu0 0.0
    %1217 = vmatpush1.xpose.msra.mxu0 0.0
    %1218 = vmatprep.subr.mxu0 0.0
    %1219 = vmatpush1.xpose.msra.mxu0 0.0
    %1220 = vmatprep.subr.mxu0 0.0
    %1221 = vmatpush1.xpose.msra.mxu0 0.0
    %1222 = vmatprep.subr.mxu0 0.0
    %1223 = vmatpush1.xpose.msra.mxu0 0.0
    %1224 = vmatprep.subr.mxu0 0.0
    %1225 = vmatpush1.xpose.msra.mxu0 0.0
    %1226 = vmatprep.subr.mxu0 0.0
    %1227 = vmatpush1.xpose.msra.mxu0 0.0
    %1228 = vmatprep.subr.mxu0 0.0
    %1229 = vmatpush1.xpose.msra.mxu0 0.0
    %1230 = vmatprep.subr.mxu0 0.0
    %1231 = vmatpush1.xpose.msra.mxu0 0.0
    %1232 = vmatprep.subr.mxu0 0.0
    %1233 = vmatpush1.xpose.msra.mxu0 0.0
    %1234 = vmatprep.subr.mxu0 0.0
    %1235 = vmatpush1.xpose.msra.mxu0 0.0
    %1236 = vmatprep.subr.mxu0 0.0
    %1237 = vmatpush1.xpose.msra.mxu0 0.0
    %1238 = vmatprep.subr.mxu0 0.0
    %1239 = vmatpush1.xpose.msra.mxu0 0.0
    %1240 = vmatprep.subr.mxu0 0.0
    %1241 = vmatpush1.xpose.msra.mxu0 0.0
    %1242 = vmatprep.subr.mxu0 0.0
    %1243 = vmatpush1.xpose.msra.mxu0 0.0
    %1244 = vmatprep.subr.mxu0 0.0
    %1245 = vmatpush1.xpose.msra.mxu0 0.0
    %1246 = vmatprep.subr.mxu0 0.0
    %1247 = vmatpush1.xpose.msra.mxu0 0.0
    %1248 = vmatprep.subr.mxu0 0.0
    %1249 = vmatpush1.xpose.msra.mxu0 0.0
    %1250 = vmatprep.subr.mxu0 0.0
    %1251 = vmatpush1.xpose.msra.mxu0 0.0
    %1252 = vmatprep.subr.mxu0 0.0
    %1253 = vmatpush1.xpose.msra.mxu0 0.0
    %1254 = vmatprep.subr.mxu0 0.0
    %1255 = vmatpush1.xpose.msra.mxu0 0.0
    %1256 = vmatprep.subr.mxu0 0.0
    %1257 = vmatpush1.xpose.msra.mxu0 0.0
    %1258 = vmatprep.subr.mxu0 0.0
    %1259 = vmatpush1.xpose.msra.mxu0 0.0
    %1260 = vmatprep.subr.mxu0 0.0
    %1261 = vmatpush1.xpose.msra.mxu0 0.0
    %1262 = vmatprep.subr.mxu0 0.0
    %1263 = vmatpush1.xpose.msra.mxu0 0.0
    %1264 = vmatprep.mubr.f32.mxu0 0.0
    %1265 = vmatmul.mubr.f32.gmra.mrb[0].mxu0 %v1192
    %v1266 = vpop.f32.mrb[0].mxu0
    %v1267 = vadd.f32 0.0, %v1266
    %v1268 = vpop.f32.mrb[0].mxu0
    %1269 = vmatprep.mubr.f32.mxu0 0.0
    %1270 = vmatmul.mubr.f32.gmra.mrb[0].mxu0 %v1194
    %v1271 = vpop.f32.mrb[0].mxu0
    %v1272 = vadd.f32 0.0, %v1271
    %v1273 = vpop.f32.mrb[0].mxu0
    %1274 = vdwg.mxu0
    %v1275 = vsel %vm417, %v1267, -inf
    %1276 = vmax.xlane.f32.xlu0 %v1275
    %v1277 = vpop.xlane.xlu0 %1276
    %v1278 = vsel %vm417, %v1272, -inf
    %1279 = vmax.xlane.f32.xlu0 %v1278
    %v1280 = vpop.xlane.xlu0 %1279
    %v1281 = vsub.f32 %v1267, %v1277
    %v1282 = vsub.f32 %v1272, %v1280
    %v1283 = vmul.f32 %v1281, 1.442695
    %v1284 = vpow.pop %v1283
    %v1285 = vmul.f32 %v1282, 1.442695
    %v1286 = vpow.pop %v1285
    %v1287 = vsel %vm417, %v1284, 0.0
    %1288 = vadd.xlane.f32.xlu0 %v1287
    %v1289 = vpop.xlane.xlu0 %1288
    %v1290 = vsel %vm417, %v1286, 0.0
    %1291 = vadd.xlane.f32.xlu0 %v1290
    %v1292 = vpop.xlane.xlu0 %1291
    %v1293 = vrcp.pop %v1289
    %v1294 = vrcp.pop %v1292
    %v1295 = vmul.f32 %v1284, %v1293
    %v1296 = vmul.f32 %v1286, %v1294
    %1299 = vrot.lane.b32.xlu0 %v404, 112
    %v1300 = vpop.permute.xlu0 %1299
    %1301 = vrot.lane.b32.xlu0 %v409, 112
    %v1302 = vpop.permute.xlu0 %1301
    %v1306 = vsel %vm417, %v1295, 0
    %v1309 = vsel %vm417, %v1296, 0
    %1311 = vmatprep.subr.mxu0 0.0
    %1312 = vmatpush1.msra.mxu0 %v1300
    %1313 = vmatprep.subr.mxu0 0.0
    %1314 = vmatpush1.msra.mxu0 %v1302
    %1315 = vmatprep.subr.mxu0 0.0
    %1316 = vmatpush1.msra.mxu0 0.0
    %1317 = vmatprep.subr.mxu0 0.0
    %1318 = vmatpush1.msra.mxu0 0.0
    %1319 = vmatprep.subr.mxu0 0.0
    %1320 = vmatpush1.msra.mxu0 0.0
    %1321 = vmatprep.subr.mxu0 0.0
    %1322 = vmatpush1.msra.mxu0 0.0
    %1323 = vmatprep.subr.mxu0 0.0
    %1324 = vmatpush1.msra.mxu0 0.0
    %1325 = vmatprep.subr.mxu0 0.0
    %1326 = vmatpush1.msra.mxu0 0.0
    %1327 = vmatprep.subr.mxu0 0.0
    %1328 = vmatpush1.msra.mxu0 0.0
    %1329 = vmatprep.subr.mxu0 0.0
    %1330 = vmatpush1.msra.mxu0 0.0
    %1331 = vmatprep.subr.mxu0 0.0
    %1332 = vmatpush1.msra.mxu0 0.0
    %1333 = vmatprep.subr.mxu0 0.0
    %1334 = vmatpush1.msra.mxu0 0.0
    %1335 = vmatprep.subr.mxu0 0.0
    %1336 = vmatpush1.msra.mxu0 0.0
    %1337 = vmatprep.subr.mxu0 0.0
    %1338 = vmatpush1.msra.mxu0 0.0
    %1339 = vmatprep.subr.mxu0 0.0
    %1340 = vmatpush1.msra.mxu0 0.0
    %1341 = vmatprep.subr.mxu0 0.0
    %1342 = vmatpush1.msra.mxu0 0.0
    %1343 = vmatprep.subr.mxu0 0.0
    %1344 = vmatpush1.msra.mxu0 0.0
    %1345 = vmatprep.subr.mxu0 0.0
    %1346 = vmatpush1.msra.mxu0 0.0
    %1347 = vmatprep.subr.mxu0 0.0
    %1348 = vmatpush1.msra.mxu0 0.0
    %1349 = vmatprep.subr.mxu0 0.0
    %1350 = vmatpush1.msra.mxu0 0.0
    %1351 = vmatprep.subr.mxu0 0.0
    %1352 = vmatpush1.msra.mxu0 0.0
    %1353 = vmatprep.subr.mxu0 0.0
    %1354 = vmatpush1.msra.mxu0 0.0
    %1355 = vmatprep.subr.mxu0 0.0
    %1356 = vmatpush1.msra.mxu0 0.0
    %1357 = vmatprep.subr.mxu0 0.0
    %1358 = vmatpush1.msra.mxu0 0.0
    %1359 = vmatprep.subr.mxu0 0.0
    %1360 = vmatpush1.msra.mxu0 0.0
    %1361 = vmatprep.subr.mxu0 0.0
    %1362 = vmatpush1.msra.mxu0 0.0
    %1363 = vmatprep.subr.mxu0 0.0
    %1364 = vmatpush1.msra.mxu0 0.0
    %1365 = vmatprep.subr.mxu0 0.0
    %1366 = vmatpush1.msra.mxu0 0.0
    %1367 = vmatprep.subr.mxu0 0.0
    %1368 = vmatpush1.msra.mxu0 0.0
    %1369 = vmatprep.subr.mxu0 0.0
    %1370 = vmatpush1.msra.mxu0 0.0
    %1371 = vmatprep.subr.mxu0 0.0
    %1372 = vmatpush1.msra.mxu0 0.0
    %1373 = vmatprep.subr.mxu0 0.0
    %1374 = vmatpush1.msra.mxu0 0.0
    %1375 = vmatprep.mubr.f32.mxu0 0.0
    %1376 = vmatmul.mubr.f32.gmra.mrb[0].mxu0 %v1306
    %v1377 = vpop.f32.mrb[0].mxu0
    %v1378 = vadd.f32 0.0, %v1377
    %v1379 = vpop.f32.mrb[0].mxu0
    %1380 = vmatprep.mubr.f32.mxu0 0.0
    %1381 = vmatmul.mubr.f32.gmra.mrb[0].mxu0 %v1309
    %v1382 = vpop.f32.mrb[0].mxu0
    %v1383 = vadd.f32 0.0, %v1382
    %v1384 = vpop.f32.mrb[0].mxu0
    %1385 = vdwg.mxu0
    %v1387 = vsel %vm417, %v1378, 0
    %v1390 = vsel %vm417, %v1383, 0
    %1392 = vmatprep.subr.mxu0 0.0
    %1393 = vmatpush1.msra.mxu0 %v414
    %1394 = vmatprep.subr.mxu0 0.0
    %1395 = vmatpush1.msra.mxu0 %v415
    %1396 = vmatprep.subr.mxu0 0.0
    %1397 = vmatpush1.msra.mxu0 0.0
    %1398 = vmatprep.subr.mxu0 0.0
    %1399 = vmatpush1.msra.mxu0 0.0
    %1400 = vmatprep.subr.mxu0 0.0
    %1401 = vmatpush1.msra.mxu0 0.0
    %1402 = vmatprep.subr.mxu0 0.0
    %1403 = vmatpush1.msra.mxu0 0.0
    %1404 = vmatprep.subr.mxu0 0.0
    %1405 = vmatpush1.msra.mxu0 0.0
    %1406 = vmatprep.subr.mxu0 0.0
    %1407 = vmatpush1.msra.mxu0 0.0
    %1408 = vmatprep.subr.mxu0 0.0
    %1409 = vmatpush1.msra.mxu0 0.0
    %1410 = vmatprep.subr.mxu0 0.0
    %1411 = vmatpush1.msra.mxu0 0.0
    %1412 = vmatprep.subr.mxu0 0.0
    %1413 = vmatpush1.msra.mxu0 0.0
    %1414 = vmatprep.subr.mxu0 0.0
    %1415 = vmatpush1.msra.mxu0 0.0
    %1416 = vmatprep.subr.mxu0 0.0
    %1417 = vmatpush1.msra.mxu0 0.0
    %1418 = vmatprep.subr.mxu0 0.0
    %1419 = vmatpush1.msra.mxu0 0.0
    %1420 = vmatprep.subr.mxu0 0.0
    %1421 = vmatpush1.msra.mxu0 0.0
    %1422 = vmatprep.subr.mxu0 0.0
    %1423 = vmatpush1.msra.mxu0 0.0
    %1424 = vmatprep.subr.mxu0 0.0
    %1425 = vmatpush1.msra.mxu0 0.0
    %1426 = vmatprep.subr.mxu0 0.0
    %1427 = vmatpush1.msra.mxu0 0.0
    %1428 = vmatprep.subr.mxu0 0.0
    %1429 = vmatpush1.msra.mxu0 0.0
    %1430 = vmatprep.subr.mxu0 0.0
    %1431 = vmatpush1.msra.mxu0 0.0
    %1432 = vmatprep.subr.mxu0 0.0
    %1433 = vmatpush1.msra.mxu0 0.0
    %1434 = vmatprep.subr.mxu0 0.0
    %1435 = vmatpush1.msra.mxu0 0.0
    %1436 = vmatprep.subr.mxu0 0.0
    %1437 = vmatpush1.msra.mxu0 0.0
    %1438 = vmatprep.subr.mxu0 0.0
    %1439 = vmatpush1.msra.mxu0 0.0
    %1440 = vmatprep.subr.mxu0 0.0
    %1441 = vmatpush1.msra.mxu0 0.0
    %1442 = vmatprep.subr.mxu0 0.0
    %1443 = vmatpush1.msra.mxu0 0.0
    %1444 = vmatprep.subr.mxu0 0.0
    %1445 = vmatpush1.msra.mxu0 0.0
    %1446 = vmatprep.subr.mxu0 0.0
    %1447 = vmatpush1.msra.mxu0 0.0
    %1448 = vmatprep.subr.mxu0 0.0
    %1449 = vmatpush1.msra.mxu0 0.0
    %1450 = vmatprep.subr.mxu0 0.0
    %1451 = vmatpush1.msra.mxu0 0.0
    %1452 = vmatprep.subr.mxu0 0.0
    %1453 = vmatpush1.msra.mxu0 0.0
    %1454 = vmatprep.subr.mxu0 0.0
    %1455 = vmatpush1.msra.mxu0 0.0
    %1456 = vmatprep.mubr.f32.mxu0 0.0
    %1457 = vmatmul.mubr.f32.gmra.mrb[0].mxu0 %v1387
    %v1458 = vpop.f32.mrb[0].mxu0
    %v1459 = vadd.f32 0.0, %v1458
    %v1460 = vpop.f32.mrb[0].mxu0
    %1461 = vmatprep.mubr.f32.mxu0 0.0
    %1462 = vmatmul.mubr.f32.gmra.mrb[0].mxu0 %v1390
    %v1463 = vpop.f32.mrb[0].mxu0
    %v1464 = vadd.f32 0.0, %v1463
    %v1465 = vpop.f32.mrb[0].mxu0
    %1466 = vdwg.mxu0
    %v1468 = vsel %vm417, %v1176, 0
    %v1471 = vsel %vm417, %v1181, 0
    %1473 = vmatprep.subr.mxu0 0.0
    %1474 = vmatpush1.msra.mxu0 %v412
    %1475 = vmatprep.subr.mxu0 0.0
    %1476 = vmatpush1.msra.mxu0 %v413
    %1477 = vmatprep.subr.mxu0 0.0
    %1478 = vmatpush1.msra.mxu0 0.0
    %1479 = vmatprep.subr.mxu0 0.0
    %1480 = vmatpush1.msra.mxu0 0.0
    %1481 = vmatprep.subr.mxu0 0.0
    %1482 = vmatpush1.msra.mxu0 0.0
    %1483 = vmatprep.subr.mxu0 0.0
    %1484 = vmatpush1.msra.mxu0 0.0
    %1485 = vmatprep.subr.mxu0 0.0
    %1486 = vmatpush1.msra.mxu0 0.0
    %1487 = vmatprep.subr.mxu0 0.0
    %1488 = vmatpush1.msra.mxu0 0.0
    %1489 = vmatprep.subr.mxu0 0.0
    %1490 = vmatpush1.msra.mxu0 0.0
    %1491 = vmatprep.subr.mxu0 0.0
    %1492 = vmatpush1.msra.mxu0 0.0
    %1493 = vmatprep.subr.mxu0 0.0
    %1494 = vmatpush1.msra.mxu0 0.0
    %1495 = vmatprep.subr.mxu0 0.0
    %1496 = vmatpush1.msra.mxu0 0.0
    %1497 = vmatprep.subr.mxu0 0.0
    %1498 = vmatpush1.msra.mxu0 0.0
    %1499 = vmatprep.subr.mxu0 0.0
    %1500 = vmatpush1.msra.mxu0 0.0
    %1501 = vmatprep.subr.mxu0 0.0
    %1502 = vmatpush1.msra.mxu0 0.0
    %1503 = vmatprep.subr.mxu0 0.0
    %1504 = vmatpush1.msra.mxu0 0.0
    %1505 = vmatprep.subr.mxu0 0.0
    %1506 = vmatpush1.msra.mxu0 0.0
    %1507 = vmatprep.subr.mxu0 0.0
    %1508 = vmatpush1.msra.mxu0 0.0
    %1509 = vmatprep.subr.mxu0 0.0
    %1510 = vmatpush1.msra.mxu0 0.0
    %1511 = vmatprep.subr.mxu0 0.0
    %1512 = vmatpush1.msra.mxu0 0.0
    %1513 = vmatprep.subr.mxu0 0.0
    %1514 = vmatpush1.msra.mxu0 0.0
    %1515 = vmatprep.subr.mxu0 0.0
    %1516 = vmatpush1.msra.mxu0 0.0
    %1517 = vmatprep.subr.mxu0 0.0
    %1518 = vmatpush1.msra.mxu0 0.0
    %1519 = vmatprep.subr.mxu0 0.0
    %1520 = vmatpush1.msra.mxu0 0.0
    %1521 = vmatprep.subr.mxu0 0.0
    %1522 = vmatpush1.msra.mxu0 0.0
    %1523 = vmatprep.subr.mxu0 0.0
    %1524 = vmatpush1.msra.mxu0 0.0
    %1525 = vmatprep.subr.mxu0 0.0
    %1526 = vmatpush1.msra.mxu0 0.0
    %1527 = vmatprep.subr.mxu0 0.0
    %1528 = vmatpush1.msra.mxu0 0.0
    %1529 = vmatprep.subr.mxu0 0.0
    %1530 = vmatpush1.msra.mxu0 0.0
    %1531 = vmatprep.subr.mxu0 0.0
    %1532 = vmatpush1.msra.mxu0 0.0
    %1533 = vmatprep.subr.mxu0 0.0
    %1534 = vmatpush1.msra.mxu0 0.0
    %1535 = vmatprep.subr.mxu0 0.0
    %1536 = vmatpush1.msra.mxu0 0.0
    %1537 = vmatprep.mubr.f32.mxu0 0.0
    %1538 = vmatmul.mubr.f32.gmra.mrb[0].mxu0 %v1468
    %v1539 = vpop.f32.mrb[0].mxu0
    %v1540 = vadd.f32 %v1459, %v1539
    %v1541 = vpop.f32.mrb[0].mxu0
    %1542 = vmatprep.mubr.f32.mxu0 0.0
    %1543 = vmatmul.mubr.f32.gmra.mrb[0].mxu0 %v1471
    %v1544 = vpop.f32.mrb[0].mxu0
    %v1545 = vadd.f32 %v1464, %v1544
    %v1546 = vpop.f32.mrb[0].mxu0
    %1547 = vdwg.mxu0
    %1548 = vrot.lane.b32.xlu0 %v1295, 16
    %v1549 = vpop.permute.xlu0 %1548
    %1550 = vrot.lane.b32.xlu0 %v1296, 16
    %v1551 = vpop.permute.xlu0 %1550
    %v1554 = vsel %vm417, %v1101, %v1549
    %v1555 = vsel %vm417, %v1102, %v1551
    %s1556 = scalar_lea.vmem %s10, 16
    %1557 = vst.msk [vmem:[%s1556] sm:$0xff] %vm118, %v1554
    %1558 = vst.msk [vmem:[%s1556 + $0x8] sm:$0xff] %vm118, %v1555
    %v1559 = vadd.f32 %v1540, %v986
    %v1560 = vadd.f32 %v1545, %v986
    %v1561 = vadd.f32 %v1559, %v105
    %v1562 = vadd.f32 %v1560, %v106
    %s1563 = scalar_lea.vmem [#allocation11], 16
    %1564 = vst.msk [vmem:[%s1563] sm:$0xff] %vm118, %v1561
    %1565 = vst.msk [vmem:[%s1563 + $0x8] sm:$0xff] %vm118, %v1562
    // Predicated region
    $region58: #{mha_forward.1} parent=1 // pred_check
      _
    $region59: #{mha_forward.1} parent=1 // pred_check_branch
      %1567 = sbr.rel (0) target = $region61
    $region60: #{mha_forward.1} parent=1 // pred_region
      %s1569 = ssub.s32 512, 512
      %1570 = vsyncadd [#allocation4], %s1569
      %s1571 = sshll.u32 [#allocation11], 4
      %s1572 = int_to_ptr.vmem [resolvable:$true] %s1571
      %1577 = dma.vmem_to_hbm [thread:$0]  %s1572, 512, %s9, [#allocation4], 128, 128, 8
    $region61: #{mha_forward.1} parent=1 // pred_fallthru
      _
    // Predicated region
    $region62: #{mha_forward.1} parent=1 // pred_check
      _
    $region63: #{mha_forward.1} parent=1 // pred_check_branch
      %1579 = sbr.rel (0) target = $region65
    $region64: #{mha_forward.1} parent=1 // pred_region
      _
    $region65: #{mha_forward.1} parent=1 // pred_fallthru
      _
    // Predicated region
    $region66: #{mha_forward.1} parent=1 // pred_check
      _
    $region67: #{mha_forward.1} parent=1 // pred_check_branch
      %1581 = sbr.rel (0) target = $region69
    $region68: #{mha_forward.1} parent=1 // pred_region
      %1582 = dma.done [#allocation4], 512
    $region69: #{mha_forward.1} parent=1 // pred_fallthru
      _
    // Predicated region
    $region70: #{mha_forward.1} parent=1 // pred_check
      _
    $region71: #{mha_forward.1} parent=1 // pred_check_branch
      %1584 = sbr.rel (0) target = $region73
    $region72: #{mha_forward.1} parent=1 // pred_region
      _
    $region73: #{mha_forward.1} parent=1 // pred_fallthru
      _
    %1585 = vsyncpa [#allocation3], 1
    %1586 = vsyncpa [#allocation6], 1
    %1587 = vsyncpa [#allocation9], 1
    %1588 = vsyncpa [#allocation4], 1

</llo_original>
